<compile_context>
chip_gen: v7x
topology: tpu7x:2x2x1
jax: 0.10.0
libtpu: 0.0.40
codegen_flags: <defaults>
</compile_context>

<pallas_src>
import functools

import numpy as np
import jax
import jax.numpy as jnp
from jax import lax
from jax.experimental import pallas as pl
from jax.experimental.pallas import tpu as pltpu

KSIZE = 7
PAD = 3


def _conv_as_matrix(conv_w, H, W):
    """(1,2,7,7) conv weights -> dense im2col matrix M of shape (2*H*W, H*W) so
    that conv(pool)[i, j] == (pool_flat @ M)[i*W + j] with pool_flat laid out as
    [max_channel.flatten(), mean_channel.flatten()]."""
    K = KSIZE
    w_flat = jnp.asarray(conv_w, jnp.float32).reshape(-1)                  # (2*K*K,)
    c = np.arange(2)[:, None, None, None, None]
    i2 = np.arange(H)[None, :, None, None, None]   # input row
    j2 = np.arange(W)[None, None, :, None, None]   # input col
    i1 = np.arange(H)[None, None, None, :, None]   # output row
    j1 = np.arange(W)[None, None, None, None, :]   # output col
    ki = i2 - i1 + PAD
    kj = j2 - j1 + PAD
    valid = (ki >= 0) & (ki < K) & (kj >= 0) & (kj < K)
    valid = np.broadcast_to(valid, (2, H, W, H, W)).reshape(2 * H * W, H * W)
    idx = c * K * K + np.clip(ki, 0, K - 1) * K + np.clip(kj, 0, K - 1)
    idx = np.broadcast_to(idx, (2, H, W, H, W)).reshape(2 * H * W, H * W)
    return jnp.where(jnp.asarray(valid), jnp.take(w_flat, jnp.asarray(idx)),
                     jnp.float32(0.0))


def _pick_bt(B, C, HW):
    """Images packed per grid step: amortizes the ~0.35us per-step overhead,
    keeps the row block a multiple of 8 sublanes (or the full batch), leaves
    >=2 grid steps for large B (megacore sharding), and keeps the x block plus
    its (Bt*C, HW) f32 intermediates within a conservative VMEM budget."""
    img_bytes = C * HW * 4
    budget = 6 << 20                      # ~6 MiB of working set per step
    if B <= 8 and 6 * B * img_bytes <= budget:
        return B
    for bt in (16, 8, 4, 2, 1):
        if (B % bt == 0 and B // bt >= 2 and (bt * C) % 8 == 0
                and 6 * bt * img_bytes <= budget):
            return bt
    return B


def _fr_kernel(x_ref, m_ref, grow_ref, gcol_ref, growt_ref, gcolt_ref, out_ref,
               *, Bt, C, H, W):
    HW = H * W
    x2 = x_ref[...]          # (Bt*C, HW)  lane-dense image rows
    grow = grow_ref[...]     # (HW, H)  one-hot: flat q -> its row index
    gcol = gcol_ref[...]     # (HW, W)  one-hot: flat q -> its column index
    growt = growt_ref[...]   # (H, HW)  row   -> all flat q in that row
    gcolt = gcolt_ref[...]   # (W, HW)  col   -> all flat q in that column

    aligned = (C % 8 == 0)   # (Bt, C, HW) reshape is tile-aligned -> free

    # ---- channel-wise max & mean per image (vector sublane reduces) ----
    if aligned:
        x3 = x2.reshape(Bt, C, HW)
        mx_all = jnp.max(x3, axis=1)                                    # (Bt, HW)
        mn_all = jnp.sum(x3, axis=1) * (1.0 / C)                        # (Bt, HW)
    else:
        mx_rows, mn_rows = [], []
        for b in range(Bt):
            xb = x2[b * C:(b + 1) * C, :]
            mx_rows.append(jnp.max(xb, axis=0, keepdims=True))
            mn_rows.append(jnp.sum(xb, axis=0, keepdims=True) * (1.0 / C))
        mx_all = jnp.concatenate(mx_rows, axis=0)
        mn_all = jnp.concatenate(mn_rows, axis=0)

    # ---- 7x7 conv (2 -> 1 channel, pad 3, no bias) as one MXU matmul ----
    pool = jnp.concatenate([mx_all, mn_all], axis=1)                    # (Bt, 2*HW)
    sc = jnp.dot(pool, m_ref[...], preferred_element_type=jnp.float32)  # (Bt, HW)

    # ---- softmax over W (per row) and over H (per column), kept flat ----
    # Subtracting the per-image global max is an exact shift for both softmaxes.
    g = jnp.max(sc, axis=1, keepdims=True)                              # (Bt, 1)
    e = jnp.exp(sc - g)                                                 # (Bt, HW)
    inv_dw = 1.0 / jnp.dot(e, grow, preferred_element_type=jnp.float32)    # (Bt, H)
    inv_dh = 1.0 / jnp.dot(e, gcol, preferred_element_type=jnp.float32)    # (Bt, W)
    watt = e * jnp.dot(inv_dw, growt, preferred_element_type=jnp.float32)  # (Bt, HW)
    hatt = e * jnp.dot(inv_dh, gcolt, preferred_element_type=jnp.float32)  # (Bt, HW)

    # ---- spatial means (the AvgPool branches) on the MXU, expanded back to q ----
    mean_w_q = jnp.dot(
        jnp.dot(x2, grow, preferred_element_type=jnp.float32) * (1.0 / W),
        growt, preferred_element_type=jnp.float32)                      # (Bt*C, HW)
    mean_h_q = jnp.dot(
        jnp.dot(x2, gcol, preferred_element_type=jnp.float32) * (1.0 / H),
        gcolt, preferred_element_type=jnp.float32)                      # (Bt*C, HW)

    # ---- replicate each image's attention row across its C channel rows ----
    if aligned:
        watt_x = jnp.broadcast_to(watt[:, None, :], (Bt, C, HW)).reshape(Bt * C, HW)
        hatt_x = jnp.broadcast_to(hatt[:, None, :], (Bt, C, HW)).reshape(Bt * C, HW)
    else:
        watt_x = jnp.concatenate(
            [jnp.broadcast_to(watt[b:b + 1, :], (C, HW)) for b in range(Bt)], axis=0)
        hatt_x = jnp.concatenate(
            [jnp.broadcast_to(hatt[b:b + 1, :], (C, HW)) for b in range(Bt)], axis=0)

    # ---- attention-weighted features (the two bmm's), on the MXU ----
    fh_t = jnp.dot(watt_x * mean_h_q, grow, preferred_element_type=jnp.float32)  # (Bt*C, H)
    fw_t = jnp.dot(hatt_x * mean_w_q, gcol, preferred_element_type=jnp.float32)  # (Bt*C, W)

    out_ref[...] = jnp.concatenate([fh_t, fw_t], axis=1)                # (Bt*C, H+W)


def fr_block(x, conv_w):
    B, C, H, W = x.shape
    assert H == W, "FR_block's final concat requires square spatial dims"
    HW = H * W
    Bt = _pick_bt(B, C, HW)
    grid = (B // Bt,)

    x2 = x.reshape(B * C, HW).astype(jnp.float32)
    m = _conv_as_matrix(conv_w, H, W)                                     # (2*HW, HW)
    q = np.arange(HW)
    grow = jnp.asarray((q[:, None] // W == np.arange(H)[None, :]).astype(np.float32))
    gcol = jnp.asarray((q[:, None] % W == np.arange(W)[None, :]).astype(np.float32))
    growt = jnp.asarray((np.arange(H)[:, None] == (q[None, :] // W)).astype(np.float32))
    gcolt = jnp.asarray((np.arange(W)[:, None] == (q[None, :] % W)).astype(np.float32))

    kernel = functools.partial(_fr_kernel, Bt=Bt, C=C, H=H, W=W)
    out2 = pl.pallas_call(
        kernel,
        out_shape=jax.ShapeDtypeStruct((B * C, H + W), jnp.float32),
        grid=grid,
        in_specs=[
            pl.BlockSpec((Bt * C, HW), lambda i: (i, 0)),
            pl.BlockSpec((2 * HW, HW), lambda i: (0, 0)),
            pl.BlockSpec((HW, H), lambda i: (0, 0)),
            pl.BlockSpec((HW, W), lambda i: (0, 0)),
            pl.BlockSpec((H, HW), lambda i: (0, 0)),
            pl.BlockSpec((W, HW), lambda i: (0, 0)),
        ],
        out_specs=pl.BlockSpec((Bt * C, H + W), lambda i: (i, 0)),
        compiler_params=pltpu.CompilerParams(dimension_semantics=("parallel",)),
    )(x2, m, grow, gcol, growt, gcolt)

    # Non-redundant kernel result -> module output (B, H+W, C, W) via a free
    # wrapper-side transpose + W-broadcast (matches the repeat/permute/cat).
    out3 = jnp.transpose(out2.reshape(B, C, H + W), (0, 2, 1))            # (B, H+W, C)
    return jnp.broadcast_to(out3[:, :, :, None], (B, H + W, C, W))


def fr_block_ref(x, conv_w):
    """Pure-JAX reference reproducing the PyTorch forward."""
    B, C, H, W = x.shape
    mx = jnp.max(x, axis=1, keepdims=True)
    mn = jnp.mean(x, axis=1, keepdims=True)
    pool = jnp.concatenate([mx, mn], axis=1)
    sc = lax.conv_general_dilated(
        pool, conv_w, window_strides=(1, 1), padding=[(PAD, PAD), (PAD, PAD)],
        dimension_numbers=("NCHW", "OIHW", "NCHW"))[:, 0]                # (B, H, W)
    w_att = jax.nn.softmax(sc, axis=2)
    h_att = jax.nn.softmax(jnp.transpose(sc, (0, 2, 1)), axis=2)
    f_hxc = jnp.transpose(jnp.mean(x, axis=3), (0, 2, 1))                # (B, H, C)
    f_wxc = jnp.transpose(jnp.mean(x, axis=2), (0, 2, 1))                # (B, W, C)
    fh = jnp.einsum("bhw,bwc->bhc", w_att, f_wxc)
    fw = jnp.einsum("bwh,bhc->bwc", h_att, f_hxc)
    fh_out = jnp.broadcast_to(fh[:, :, :, None], (B, H, C, W))
    fw_out = jnp.broadcast_to(fw[:, :, :, None], (B, W, C, H))
    return jnp.concatenate([fh_out, fw_out], axis=1)


if __name__ == "__main__":
    key = jax.random.PRNGKey(0)
    kx, kw = jax.random.split(key)
    B, C, H, W = 2, 8, 16, 16
    x = jax.random.normal(kx, (B, C, H, W), dtype=jnp.float32)
    conv_w = 0.1 * jax.random.normal(kw, (1, 2, KSIZE, KSIZE), dtype=jnp.float32)

    out = jax.block_until_ready(jax.jit(fr_block)(x, conv_w))
    ref = fr_block_ref(x, conv_w)
    np.testing.assert_allclose(np.asarray(out), np.asarray(ref), rtol=1e-3, atol=1e-3)
    print("KERNEL_OK")
</pallas_src>

<mosaic_0001>
module attributes {stable_mosaic.version = 11 : i64} {
  func.func @_fr_kernel(%arg0: i32, %arg1: memref<16x256xf32, #tpu.memory_space<vmem>>, %arg2: memref<512x256xf32, #tpu.memory_space<vmem>>, %arg3: memref<256x16xf32, #tpu.memory_space<vmem>>, %arg4: memref<256x16xf32, #tpu.memory_space<vmem>>, %arg5: memref<16x256xf32, #tpu.memory_space<vmem>>, %arg6: memref<16x256xf32, #tpu.memory_space<vmem>>, %arg7: memref<16x32xf32, #tpu.memory_space<vmem>>) attributes {dimension_semantics = [#tpu.dimension_semantics<parallel>], iteration_bounds = array<i64: 1>, scalar_prefetch = 0 : i64, scratch_operands = 0 : i64, tpu.core_type = #tpu.core_type<tc>, window_params = [{transform_indices = @transform_0, window_bounds = array<i64: 16, 256>}, {pipeline_mode = #tpu.pipeline_mode<synchronous>, transform_indices = @transform_1, window_bounds = array<i64: 512, 256>}, {pipeline_mode = #tpu.pipeline_mode<synchronous>, transform_indices = @transform_2, window_bounds = array<i64: 256, 16>}, {pipeline_mode = #tpu.pipeline_mode<synchronous>, transform_indices = @transform_3, window_bounds = array<i64: 256, 16>}, {pipeline_mode = #tpu.pipeline_mode<synchronous>, transform_indices = @transform_4, window_bounds = array<i64: 16, 256>}, {pipeline_mode = #tpu.pipeline_mode<synchronous>, transform_indices = @transform_5, window_bounds = array<i64: 16, 256>}, {transform_indices = @transform_6, window_bounds = array<i64: 16, 32>}]} {
    %c0 = arith.constant 0 : index
    %c0_0 = arith.constant 0 : index
    %0 = vector.load %arg1[%c0, %c0_0] : memref<16x256xf32, #tpu.memory_space<vmem>>, vector<16x256xf32>
    %c0_1 = arith.constant 0 : index
    %c0_2 = arith.constant 0 : index
    %1 = vector.load %arg3[%c0_1, %c0_2] : memref<256x16xf32, #tpu.memory_space<vmem>>, vector<256x16xf32>
    %c0_3 = arith.constant 0 : index
    %c0_4 = arith.constant 0 : index
    %2 = vector.load %arg4[%c0_3, %c0_4] : memref<256x16xf32, #tpu.memory_space<vmem>>, vector<256x16xf32>
    %c0_5 = arith.constant 0 : index
    %c0_6 = arith.constant 0 : index
    %3 = vector.load %arg5[%c0_5, %c0_6] : memref<16x256xf32, #tpu.memory_space<vmem>>, vector<16x256xf32>
    %c0_7 = arith.constant 0 : index
    %c0_8 = arith.constant 0 : index
    %4 = vector.load %arg6[%c0_7, %c0_8] : memref<16x256xf32, #tpu.memory_space<vmem>>, vector<16x256xf32>
    %5 = vector.shape_cast %0 : vector<16x256xf32> to vector<2x8x256xf32>
    %cst = arith.constant dense<0xFF800000> : vector<2x256xf32>
    %6 = vector.multi_reduction <maximumf>, %5, %cst [1] : vector<2x8x256xf32> to vector<2x256xf32>
    %cst_9 = arith.constant dense<0.000000e+00> : vector<2x256xf32>
    %7 = vector.multi_reduction <add>, %5, %cst_9 [1] : vector<2x8x256xf32> to vector<2x256xf32>
    %cst_10 = arith.constant 1.250000e-01 : f32
    %8 = vector.broadcast %cst_10 : f32 to vector<2x256xf32>
    %9 = arith.mulf %7, %8 : vector<2x256xf32>
    %10 = tpu.concatenate %6, %9 in 1 : vector<2x256xf32>, vector<2x256xf32> -> vector<2x512xf32>
    %c0_11 = arith.constant 0 : index
    %c0_12 = arith.constant 0 : index
    %11 = vector.load %arg2[%c0_11, %c0_12] : memref<512x256xf32, #tpu.memory_space<vmem>>, vector<512x256xf32>
    %cst_13 = arith.constant dense<0.000000e+00> : vector<2x256xf32>
    %12 = tpu.matmul %10, %11, %cst_13 {dimension_numbers = #tpu.dot_dimension_numbers<[1], [0], [0], [1], [0, 0, 1, 1], [], []>} : vector<2x512xf32>, vector<512x256xf32>, vector<2x256xf32> -> vector<2x256xf32>
    %cst_14 = arith.constant dense<0xFF800000> : vector<2xf32>
    %13 = vector.multi_reduction <maximumf>, %12, %cst_14 [1] : vector<2x256xf32> to vector<2xf32>
    %14 = vector.shape_cast %13 : vector<2xf32> to vector<2x1xf32>
    %15 = vector.broadcast %14 : vector<2x1xf32> to vector<2x256xf32>
    %16 = arith.subf %12, %15 : vector<2x256xf32>
    %17 = math.exp %16 : vector<2x256xf32>
    %cst_15 = arith.constant dense<0.000000e+00> : vector<2x16xf32>
    %18 = tpu.matmul %17, %1, %cst_15 {dimension_numbers = #tpu.dot_dimension_numbers<[1], [0], [0], [1], [0, 0, 1, 1], [], []>} : vector<2x256xf32>, vector<256x16xf32>, vector<2x16xf32> -> vector<2x16xf32>
    %cst_16 = arith.constant 1.000000e+00 : f32
    %19 = vector.broadcast %cst_16 : f32 to vector<2x16xf32>
    %20 = arith.divf %19, %18 : vector<2x16xf32>
    %cst_17 = arith.constant dense<0.000000e+00> : vector<2x16xf32>
    %21 = tpu.matmul %17, %2, %cst_17 {dimension_numbers = #tpu.dot_dimension_numbers<[1], [0], [0], [1], [0, 0, 1, 1], [], []>} : vector<2x256xf32>, vector<256x16xf32>, vector<2x16xf32> -> vector<2x16xf32>
    %cst_18 = arith.constant 1.000000e+00 : f32
    %22 = vector.broadcast %cst_18 : f32 to vector<2x16xf32>
    %23 = arith.divf %22, %21 : vector<2x16xf32>
    %cst_19 = arith.constant dense<0.000000e+00> : vector<2x256xf32>
    %24 = tpu.matmul %20, %3, %cst_19 {dimension_numbers = #tpu.dot_dimension_numbers<[1], [0], [0], [1], [0, 0, 1, 1], [], []>} : vector<2x16xf32>, vector<16x256xf32>, vector<2x256xf32> -> vector<2x256xf32>
    %25 = arith.mulf %17, %24 : vector<2x256xf32>
    %cst_20 = arith.constant dense<0.000000e+00> : vector<2x256xf32>
    %26 = tpu.matmul %23, %4, %cst_20 {dimension_numbers = #tpu.dot_dimension_numbers<[1], [0], [0], [1], [0, 0, 1, 1], [], []>} : vector<2x16xf32>, vector<16x256xf32>, vector<2x256xf32> -> vector<2x256xf32>
    %27 = arith.mulf %17, %26 : vector<2x256xf32>
    %cst_21 = arith.constant dense<0.000000e+00> : vector<16x16xf32>
    %28 = tpu.matmul %0, %1, %cst_21 {dimension_numbers = #tpu.dot_dimension_numbers<[1], [0], [0], [1], [0, 0, 1, 1], [], []>} : vector<16x256xf32>, vector<256x16xf32>, vector<16x16xf32> -> vector<16x16xf32>
    %cst_22 = arith.constant 6.250000e-02 : f32
    %29 = vector.broadcast %cst_22 : f32 to vector<16x16xf32>
    %30 = arith.mulf %28, %29 : vector<16x16xf32>
    %cst_23 = arith.constant dense<0.000000e+00> : vector<16x256xf32>
    %31 = tpu.matmul %30, %3, %cst_23 {dimension_numbers = #tpu.dot_dimension_numbers<[1], [0], [0], [1], [0, 0, 1, 1], [], []>} : vector<16x16xf32>, vector<16x256xf32>, vector<16x256xf32> -> vector<16x256xf32>
    %cst_24 = arith.constant dense<0.000000e+00> : vector<16x16xf32>
    %32 = tpu.matmul %0, %2, %cst_24 {dimension_numbers = #tpu.dot_dimension_numbers<[1], [0], [0], [1], [0, 0, 1, 1], [], []>} : vector<16x256xf32>, vector<256x16xf32>, vector<16x16xf32> -> vector<16x16xf32>
    %cst_25 = arith.constant 6.250000e-02 : f32
    %33 = vector.broadcast %cst_25 : f32 to vector<16x16xf32>
    %34 = arith.mulf %32, %33 : vector<16x16xf32>
    %cst_26 = arith.constant dense<0.000000e+00> : vector<16x256xf32>
    %35 = tpu.matmul %34, %4, %cst_26 {dimension_numbers = #tpu.dot_dimension_numbers<[1], [0], [0], [1], [0, 0, 1, 1], [], []>} : vector<16x16xf32>, vector<16x256xf32>, vector<16x256xf32> -> vector<16x256xf32>
    %36 = vector.shape_cast %25 : vector<2x256xf32> to vector<2x1x256xf32>
    %37 = vector.shape_cast %36 : vector<2x1x256xf32> to vector<2x1x256xf32>
    %38 = vector.broadcast %37 : vector<2x1x256xf32> to vector<2x8x256xf32>
    %39 = vector.shape_cast %38 : vector<2x8x256xf32> to vector<16x256xf32>
    %40 = vector.shape_cast %27 : vector<2x256xf32> to vector<2x1x256xf32>
    %41 = vector.shape_cast %40 : vector<2x1x256xf32> to vector<2x1x256xf32>
    %42 = vector.broadcast %41 : vector<2x1x256xf32> to vector<2x8x256xf32>
    %43 = vector.shape_cast %42 : vector<2x8x256xf32> to vector<16x256xf32>
    %44 = arith.mulf %39, %35 : vector<16x256xf32>
    %cst_27 = arith.constant dense<0.000000e+00> : vector<16x16xf32>
    %45 = tpu.matmul %44, %1, %cst_27 {dimension_numbers = #tpu.dot_dimension_numbers<[1], [0], [0], [1], [0, 0, 1, 1], [], []>} : vector<16x256xf32>, vector<256x16xf32>, vector<16x16xf32> -> vector<16x16xf32>
    %46 = arith.mulf %43, %31 : vector<16x256xf32>
    %cst_28 = arith.constant dense<0.000000e+00> : vector<16x16xf32>
    %47 = tpu.matmul %46, %2, %cst_28 {dimension_numbers = #tpu.dot_dimension_numbers<[1], [0], [0], [1], [0, 0, 1, 1], [], []>} : vector<16x256xf32>, vector<256x16xf32>, vector<16x16xf32> -> vector<16x16xf32>
    %48 = tpu.concatenate %45, %47 in 1 : vector<16x16xf32>, vector<16x16xf32> -> vector<16x32xf32>
    %c0_29 = arith.constant 0 : index
    %c0_30 = arith.constant 0 : index
    %49 = vector.load %arg7[%c0_29, %c0_30] : memref<16x32xf32, #tpu.memory_space<vmem>>, vector<16x32xf32>
    tpu.vector_store %arg7[%c0_29, %c0_30], %48 {strides = array<i32>} : memref<16x32xf32, #tpu.memory_space<vmem>>, vector<16x32xf32>,
    return
  }
  func.func @transform_0(%arg0: i32) -> (i32, i32) {
    %c0_i32 = arith.constant 0 : i32
    %c0_i32_0 = arith.constant 0 : i32
    return %arg0, %c0_i32 : i32, i32
  }
  func.func @transform_1(%arg0: i32) -> (i32, i32) {
    %c0_i32 = arith.constant 0 : i32
    %c0_i32_0 = arith.constant 0 : i32
    %c0_i32_1 = arith.constant 0 : i32
    return %c0_i32, %c0_i32_0 : i32, i32
  }
  func.func @transform_2(%arg0: i32) -> (i32, i32) {
    %c0_i32 = arith.constant 0 : i32
    %c0_i32_0 = arith.constant 0 : i32
    %c0_i32_1 = arith.constant 0 : i32
    return %c0_i32, %c0_i32_0 : i32, i32
  }
  func.func @transform_3(%arg0: i32) -> (i32, i32) {
    %c0_i32 = arith.constant 0 : i32
    %c0_i32_0 = arith.constant 0 : i32
    %c0_i32_1 = arith.constant 0 : i32
    return %c0_i32, %c0_i32_0 : i32, i32
  }
  func.func @transform_4(%arg0: i32) -> (i32, i32) {
    %c0_i32 = arith.constant 0 : i32
    %c0_i32_0 = arith.constant 0 : i32
    %c0_i32_1 = arith.constant 0 : i32
    return %c0_i32, %c0_i32_0 : i32, i32
  }
  func.func @transform_5(%arg0: i32) -> (i32, i32) {
    %c0_i32 = arith.constant 0 : i32
    %c0_i32_0 = arith.constant 0 : i32
    %c0_i32_1 = arith.constant 0 : i32
    return %c0_i32, %c0_i32_0 : i32, i32
  }
  func.func @transform_6(%arg0: i32) -> (i32, i32) {
    %c0_i32 = arith.constant 0 : i32
    %c0_i32_0 = arith.constant 0 : i32
    return %arg0, %c0_i32 : i32, i32
  }
}

</mosaic_0001>

<llo_original>
// kernel: fr_block.1
$region0: #{fr_block.1}
  #allocation0 [shape = 'u32[]', space=smem, size = 0x4, offset = 0x4, fixed_abs, tag = 'smem constant byte address 0x4 - core index']
  #allocation1 [shape = 'u32[144,128]{1,0:T(1,128)}', space=vmem, size = 0x12000, scoped, tag = 'internal scratch']
  %s0 = inlined_call_operand.vmem [shape: f32[16,256], index: 0, kind: input, shape index: {}]
  %s1 = inlined_call_operand.vmem [shape: f32[512,256], index: 1, kind: input, shape index: {}]
  %s2 = inlined_call_operand.vmem [shape: f32[256,16], index: 2, kind: input, shape index: {}]
  %s3 = inlined_call_operand.vmem [shape: f32[256,16], index: 3, kind: input, shape index: {}]
  %s4 = inlined_call_operand.vmem [shape: f32[16,256], index: 4, kind: input, shape index: {}]
  %s5 = inlined_call_operand.vmem [shape: f32[16,256], index: 5, kind: input, shape index: {}]
  %s6 = inlined_call_operand.vmem [shape: f32[16,32], index: 6, kind: output, shape index: {}]
  %s7 = sld [smem:[#allocation0]]
  $region34: #{fr_block.1} parent=0
    _
  %s9 = ssub.s32 1, %s7
  %s10 = scalar_select 0, %s9, %s7
  // Predicated region
  $region2: #{fr_block.1} parent=0 // pred_check
    _
  $region3: #{fr_block.1} parent=0 // pred_check_branch
    %12 = sbr.rel (0) target = $region5
  $region4: #{fr_block.1} parent=0 // pred_region
    _
  $region5: #{fr_block.1} parent=0 // pred_fallthru
    _
  // Predicated region
  $region6: #{fr_block.1} parent=0 // pred_check
    _
  $region7: #{fr_block.1} parent=0 // pred_check_branch
    %14 = sbr.rel (0) target = $region9
  $region8: #{fr_block.1} parent=0 // pred_region
    _
  $region9: #{fr_block.1} parent=0 // pred_fallthru
    _
  // Predicated region
  $region10: #{fr_block.1} parent=0 // pred_check
    _
  $region11: #{fr_block.1} parent=0 // pred_check_branch
    %16 = sbr.rel (0) target = $region13
  $region12: #{fr_block.1} parent=0 // pred_region
    _
  $region13: #{fr_block.1} parent=0 // pred_fallthru
    _
  // Predicated region
  $region14: #{fr_block.1} parent=0 // pred_check
    _
  $region15: #{fr_block.1} parent=0 // pred_check_branch
    %18 = sbr.rel (0) target = $region17
  $region16: #{fr_block.1} parent=0 // pred_region
    _
  $region17: #{fr_block.1} parent=0 // pred_fallthru
    _
  // Predicated region
  $region18: #{fr_block.1} parent=0 // pred_check
    _
  $region19: #{fr_block.1} parent=0 // pred_check_branch
    %20 = sbr.rel (0) target = $region21
  $region20: #{fr_block.1} parent=0 // pred_region
    _
  $region21: #{fr_block.1} parent=0 // pred_fallthru
    _
  // Predicated region
  $region22: #{fr_block.1} parent=0 // pred_check
    _
  $region23: #{fr_block.1} parent=0 // pred_check_branch
    %22 = sbr.rel (0) target = $region25
  $region24: #{fr_block.1} parent=0 // pred_region
    _
  $region25: #{fr_block.1} parent=0 // pred_fallthru
    _
  %v23 = vld [vmem:[%s0] sm:$0xff]
  %v24 = vld [vmem:[%s0 + $0x8] sm:$0xff]
  %v25 = vld [vmem:[%s0 + $0x10] sm:$0xff]
  %v26 = vld [vmem:[%s0 + $0x18] sm:$0xff]
  %v27 = vld [vmem:[%s2] sm:$0xff]
  %v28 = vld [vmem:[%s2 + $0x8] sm:$0xff]
  %v29 = vld [vmem:[%s2 + $0x10] sm:$0xff]
  %v30 = vld [vmem:[%s2 + $0x18] sm:$0xff]
  %v31 = vld [vmem:[%s2 + $0x20] sm:$0xff]
  %v32 = vld [vmem:[%s2 + $0x28] sm:$0xff]
  %v33 = vld [vmem:[%s2 + $0x30] sm:$0xff]
  %v34 = vld [vmem:[%s2 + $0x38] sm:$0xff]
  %v35 = vld [vmem:[%s2 + $0x40] sm:$0xff]
  %v36 = vld [vmem:[%s2 + $0x48] sm:$0xff]
  %v37 = vld [vmem:[%s2 + $0x50] sm:$0xff]
  %v38 = vld [vmem:[%s2 + $0x58] sm:$0xff]
  %v39 = vld [vmem:[%s2 + $0x60] sm:$0xff]
  %v40 = vld [vmem:[%s2 + $0x68] sm:$0xff]
  %v41 = vld [vmem:[%s2 + $0x70] sm:$0xff]
  %v42 = vld [vmem:[%s2 + $0x78] sm:$0xff]
  %v43 = vld [vmem:[%s2 + $0x80] sm:$0xff]
  %v44 = vld [vmem:[%s2 + $0x88] sm:$0xff]
  %v45 = vld [vmem:[%s2 + $0x90] sm:$0xff]
  %v46 = vld [vmem:[%s2 + $0x98] sm:$0xff]
  %v47 = vld [vmem:[%s2 + $0xa0] sm:$0xff]
  %v48 = vld [vmem:[%s2 + $0xa8] sm:$0xff]
  %v49 = vld [vmem:[%s2 + $0xb0] sm:$0xff]
  %v50 = vld [vmem:[%s2 + $0xb8] sm:$0xff]
  %v51 = vld [vmem:[%s2 + $0xc0] sm:$0xff]
  %v52 = vld [vmem:[%s2 + $0xc8] sm:$0xff]
  %v53 = vld [vmem:[%s2 + $0xd0] sm:$0xff]
  %v54 = vld [vmem:[%s2 + $0xd8] sm:$0xff]
  %v55 = vld [vmem:[%s2 + $0xe0] sm:$0xff]
  %v56 = vld [vmem:[%s2 + $0xe8] sm:$0xff]
  %v57 = vld [vmem:[%s2 + $0xf0] sm:$0xff]
  %v58 = vld [vmem:[%s2 + $0xf8] sm:$0xff]
  %v59 = vld [vmem:[%s3] sm:$0xff]
  %v60 = vld [vmem:[%s3 + $0x8] sm:$0xff]
  %v61 = vld [vmem:[%s3 + $0x10] sm:$0xff]
  %v62 = vld [vmem:[%s3 + $0x18] sm:$0xff]
  %v63 = vld [vmem:[%s3 + $0x20] sm:$0xff]
  %v64 = vld [vmem:[%s3 + $0x28] sm:$0xff]
  %v65 = vld [vmem:[%s3 + $0x30] sm:$0xff]
  %v66 = vld [vmem:[%s3 + $0x38] sm:$0xff]
  %v67 = vld [vmem:[%s3 + $0x40] sm:$0xff]
  %v68 = vld [vmem:[%s3 + $0x48] sm:$0xff]
  %v69 = vld [vmem:[%s3 + $0x50] sm:$0xff]
  %v70 = vld [vmem:[%s3 + $0x58] sm:$0xff]
  %v71 = vld [vmem:[%s3 + $0x60] sm:$0xff]
  %v72 = vld [vmem:[%s3 + $0x68] sm:$0xff]
  %v73 = vld [vmem:[%s3 + $0x70] sm:$0xff]
  %v74 = vld [vmem:[%s3 + $0x78] sm:$0xff]
  %v75 = vld [vmem:[%s3 + $0x80] sm:$0xff]
  %v76 = vld [vmem:[%s3 + $0x88] sm:$0xff]
  %v77 = vld [vmem:[%s3 + $0x90] sm:$0xff]
  %v78 = vld [vmem:[%s3 + $0x98] sm:$0xff]
  %v79 = vld [vmem:[%s3 + $0xa0] sm:$0xff]
  %v80 = vld [vmem:[%s3 + $0xa8] sm:$0xff]
  %v81 = vld [vmem:[%s3 + $0xb0] sm:$0xff]
  %v82 = vld [vmem:[%s3 + $0xb8] sm:$0xff]
  %v83 = vld [vmem:[%s3 + $0xc0] sm:$0xff]
  %v84 = vld [vmem:[%s3 + $0xc8] sm:$0xff]
  %v85 = vld [vmem:[%s3 + $0xd0] sm:$0xff]
  %v86 = vld [vmem:[%s3 + $0xd8] sm:$0xff]
  %v87 = vld [vmem:[%s3 + $0xe0] sm:$0xff]
  %v88 = vld [vmem:[%s3 + $0xe8] sm:$0xff]
  %v89 = vld [vmem:[%s3 + $0xf0] sm:$0xff]
  %v90 = vld [vmem:[%s3 + $0xf8] sm:$0xff]
  %v91 = vld [vmem:[%s4] sm:$0xff]
  %v92 = vld [vmem:[%s4 + $0x8] sm:$0xff]
  %v93 = vld [vmem:[%s4 + $0x10] sm:$0xff]
  %v94 = vld [vmem:[%s4 + $0x18] sm:$0xff]
  %v95 = vld [vmem:[%s5] sm:$0xff]
  %v96 = vld [vmem:[%s5 + $0x8] sm:$0xff]
  %v97 = vld [vmem:[%s5 + $0x10] sm:$0xff]
  %v98 = vld [vmem:[%s5 + $0x18] sm:$0xff]
  %v99 = vrot.slane %v23, 4
  %v100 = vmax.f32 %v23, %v99
  %v101 = vrot.slane %v100, 2
  %v102 = vmax.f32 %v100, %v101
  %v103 = vrot.slane %v102, 1
  %v104 = vmax.f32 %v102, %v103
  %v105 = vrot.slane %v24, 4
  %v106 = vmax.f32 %v24, %v105
  %v107 = vrot.slane %v106, 2
  %v108 = vmax.f32 %v106, %v107
  %v109 = vrot.slane %v108, 1
  %v110 = vmax.f32 %v108, %v109
  %v111 = vrot.slane %v25, 4
  %v112 = vmax.f32 %v25, %v111
  %v113 = vrot.slane %v112, 2
  %v114 = vmax.f32 %v112, %v113
  %v115 = vrot.slane %v114, 1
  %v116 = vmax.f32 %v114, %v115
  %v117 = vrot.slane %v26, 4
  %v118 = vmax.f32 %v26, %v117
  %v119 = vrot.slane %v118, 2
  %v120 = vmax.f32 %v118, %v119
  %v121 = vrot.slane %v120, 1
  %v122 = vmax.f32 %v120, %v121
  %v123 = vrot.slane %v23, 4
  %v124 = vadd.f32 %v23, %v123
  %v125 = vrot.slane %v124, 2
  %v126 = vadd.f32 %v124, %v125
  %v127 = vrot.slane %v126, 1
  %v128 = vadd.f32 %v126, %v127
  %v129 = vrot.slane %v24, 4
  %v130 = vadd.f32 %v24, %v129
  %v131 = vrot.slane %v130, 2
  %v132 = vadd.f32 %v130, %v131
  %v133 = vrot.slane %v132, 1
  %v134 = vadd.f32 %v132, %v133
  %v135 = vrot.slane %v25, 4
  %v136 = vadd.f32 %v25, %v135
  %v137 = vrot.slane %v136, 2
  %v138 = vadd.f32 %v136, %v137
  %v139 = vrot.slane %v138, 1
  %v140 = vadd.f32 %v138, %v139
  %v141 = vrot.slane %v26, 4
  %v142 = vadd.f32 %v26, %v141
  %v143 = vrot.slane %v142, 2
  %v144 = vadd.f32 %v142, %v143
  %v145 = vrot.slane %v144, 1
  %v146 = vadd.f32 %v144, %v145
  %v147 = vmul.f32 %v128, 0.125
  %v148 = vmul.f32 %v134, 0.125
  %v149 = vmul.f32 %v140, 0.125
  %v150 = vmul.f32 %v146, 0.125
  %vm155 = vcmask 1041409
  %v156 = vsel %vm155, %v116, %v104
  %v157 = vsel %vm155, %v122, %v110
  %v164 = vsel %vm155, %v149, %v147
  %v165 = vsel %vm155, %v150, %v148
  %v168 = vld [vmem:[%s1] sm:$0xff]
  %v169 = vld [vmem:[%s1 + $0x8] sm:$0xff]
  %v170 = vld [vmem:[%s1 + $0x10] sm:$0xff]
  %v171 = vld [vmem:[%s1 + $0x18] sm:$0xff]
  %v172 = vld [vmem:[%s1 + $0x20] sm:$0xff]
  %v173 = vld [vmem:[%s1 + $0x28] sm:$0xff]
  %v174 = vld [vmem:[%s1 + $0x30] sm:$0xff]
  %v175 = vld [vmem:[%s1 + $0x38] sm:$0xff]
  %v176 = vld [vmem:[%s1 + $0x40] sm:$0xff]
  %v177 = vld [vmem:[%s1 + $0x48] sm:$0xff]
  %v178 = vld [vmem:[%s1 + $0x50] sm:$0xff]
  %v179 = vld [vmem:[%s1 + $0x58] sm:$0xff]
  %v180 = vld [vmem:[%s1 + $0x60] sm:$0xff]
  %v181 = vld [vmem:[%s1 + $0x68] sm:$0xff]
  %v182 = vld [vmem:[%s1 + $0x70] sm:$0xff]
  %v183 = vld [vmem:[%s1 + $0x78] sm:$0xff]
  %v184 = vld [vmem:[%s1 + $0x80] sm:$0xff]
  %v185 = vld [vmem:[%s1 + $0x88] sm:$0xff]
  %v186 = vld [vmem:[%s1 + $0x90] sm:$0xff]
  %v187 = vld [vmem:[%s1 + $0x98] sm:$0xff]
  %v188 = vld [vmem:[%s1 + $0xa0] sm:$0xff]
  %v189 = vld [vmem:[%s1 + $0xa8] sm:$0xff]
  %v190 = vld [vmem:[%s1 + $0xb0] sm:$0xff]
  %v191 = vld [vmem:[%s1 + $0xb8] sm:$0xff]
  %v192 = vld [vmem:[%s1 + $0xc0] sm:$0xff]
  %v193 = vld [vmem:[%s1 + $0xc8] sm:$0xff]
  %v194 = vld [vmem:[%s1 + $0xd0] sm:$0xff]
  %v195 = vld [vmem:[%s1 + $0xd8] sm:$0xff]
  %v196 = vld [vmem:[%s1 + $0xe0] sm:$0xff]
  %v197 = vld [vmem:[%s1 + $0xe8] sm:$0xff]
  %v198 = vld [vmem:[%s1 + $0xf0] sm:$0xff]
  %v199 = vld [vmem:[%s1 + $0xf8] sm:$0xff]
  %v200 = vld [vmem:[%s1 + $0x100] sm:$0xff]
  %v201 = vld [vmem:[%s1 + $0x108] sm:$0xff]
  %v202 = vld [vmem:[%s1 + $0x110] sm:$0xff]
  %v203 = vld [vmem:[%s1 + $0x118] sm:$0xff]
  %v204 = vld [vmem:[%s1 + $0x120] sm:$0xff]
  %v205 = vld [vmem:[%s1 + $0x128] sm:$0xff]
  %v206 = vld [vmem:[%s1 + $0x130] sm:$0xff]
  %v207 = vld [vmem:[%s1 + $0x138] sm:$0xff]
  %v208 = vld [vmem:[%s1 + $0x140] sm:$0xff]
  %v209 = vld [vmem:[%s1 + $0x148] sm:$0xff]
  %v210 = vld [vmem:[%s1 + $0x150] sm:$0xff]
  %v211 = vld [vmem:[%s1 + $0x158] sm:$0xff]
  %v212 = vld [vmem:[%s1 + $0x160] sm:$0xff]
  %v213 = vld [vmem:[%s1 + $0x168] sm:$0xff]
  %v214 = vld [vmem:[%s1 + $0x170] sm:$0xff]
  %v215 = vld [vmem:[%s1 + $0x178] sm:$0xff]
  %v216 = vld [vmem:[%s1 + $0x180] sm:$0xff]
  %v217 = vld [vmem:[%s1 + $0x188] sm:$0xff]
  %v218 = vld [vmem:[%s1 + $0x190] sm:$0xff]
  %v219 = vld [vmem:[%s1 + $0x198] sm:$0xff]
  %v220 = vld [vmem:[%s1 + $0x1a0] sm:$0xff]
  %v221 = vld [vmem:[%s1 + $0x1a8] sm:$0xff]
  %v222 = vld [vmem:[%s1 + $0x1b0] sm:$0xff]
  %v223 = vld [vmem:[%s1 + $0x1b8] sm:$0xff]
  %v224 = vld [vmem:[%s1 + $0x1c0] sm:$0xff]
  %v225 = vld [vmem:[%s1 + $0x1c8] sm:$0xff]
  %v226 = vld [vmem:[%s1 + $0x1d0] sm:$0xff]
  %v227 = vld [vmem:[%s1 + $0x1d8] sm:$0xff]
  %v228 = vld [vmem:[%s1 + $0x1e0] sm:$0xff]
  %v229 = vld [vmem:[%s1 + $0x1e8] sm:$0xff]
  %v230 = vld [vmem:[%s1 + $0x1f0] sm:$0xff]
  %v231 = vld [vmem:[%s1 + $0x1f8] sm:$0xff]
  %v232 = vld [vmem:[%s1 + $0x200] sm:$0xff]
  %v233 = vld [vmem:[%s1 + $0x208] sm:$0xff]
  %v234 = vld [vmem:[%s1 + $0x210] sm:$0xff]
  %v235 = vld [vmem:[%s1 + $0x218] sm:$0xff]
  %v236 = vld [vmem:[%s1 + $0x220] sm:$0xff]
  %v237 = vld [vmem:[%s1 + $0x228] sm:$0xff]
  %v238 = vld [vmem:[%s1 + $0x230] sm:$0xff]
  %v239 = vld [vmem:[%s1 + $0x238] sm:$0xff]
  %v240 = vld [vmem:[%s1 + $0x240] sm:$0xff]
  %v241 = vld [vmem:[%s1 + $0x248] sm:$0xff]
  %v242 = vld [vmem:[%s1 + $0x250] sm:$0xff]
  %v243 = vld [vmem:[%s1 + $0x258] sm:$0xff]
  %v244 = vld [vmem:[%s1 + $0x260] sm:$0xff]
  %v245 = vld [vmem:[%s1 + $0x268] sm:$0xff]
  %v246 = vld [vmem:[%s1 + $0x270] sm:$0xff]
  %v247 = vld [vmem:[%s1 + $0x278] sm:$0xff]
  %v248 = vld [vmem:[%s1 + $0x280] sm:$0xff]
  %v249 = vld [vmem:[%s1 + $0x288] sm:$0xff]
  %v250 = vld [vmem:[%s1 + $0x290] sm:$0xff]
  %v251 = vld [vmem:[%s1 + $0x298] sm:$0xff]
  %v252 = vld [vmem:[%s1 + $0x2a0] sm:$0xff]
  %v253 = vld [vmem:[%s1 + $0x2a8] sm:$0xff]
  %v254 = vld [vmem:[%s1 + $0x2b0] sm:$0xff]
  %v255 = vld [vmem:[%s1 + $0x2b8] sm:$0xff]
  %v256 = vld [vmem:[%s1 + $0x2c0] sm:$0xff]
  %v257 = vld [vmem:[%s1 + $0x2c8] sm:$0xff]
  %v258 = vld [vmem:[%s1 + $0x2d0] sm:$0xff]
  %v259 = vld [vmem:[%s1 + $0x2d8] sm:$0xff]
  %v260 = vld [vmem:[%s1 + $0x2e0] sm:$0xff]
  %v261 = vld [vmem:[%s1 + $0x2e8] sm:$0xff]
  %v262 = vld [vmem:[%s1 + $0x2f0] sm:$0xff]
  %v263 = vld [vmem:[%s1 + $0x2f8] sm:$0xff]
  %v264 = vld [vmem:[%s1 + $0x300] sm:$0xff]
  %v265 = vld [vmem:[%s1 + $0x308] sm:$0xff]
  %v266 = vld [vmem:[%s1 + $0x310] sm:$0xff]
  %v267 = vld [vmem:[%s1 + $0x318] sm:$0xff]
  %v268 = vld [vmem:[%s1 + $0x320] sm:$0xff]
  %v269 = vld [vmem:[%s1 + $0x328] sm:$0xff]
  %v270 = vld [vmem:[%s1 + $0x330] sm:$0xff]
  %v271 = vld [vmem:[%s1 + $0x338] sm:$0xff]
  %v272 = vld [vmem:[%s1 + $0x340] sm:$0xff]
  %v273 = vld [vmem:[%s1 + $0x348] sm:$0xff]
  %v274 = vld [vmem:[%s1 + $0x350] sm:$0xff]
  %v275 = vld [vmem:[%s1 + $0x358] sm:$0xff]
  %v276 = vld [vmem:[%s1 + $0x360] sm:$0xff]
  %v277 = vld [vmem:[%s1 + $0x368] sm:$0xff]
  %v278 = vld [vmem:[%s1 + $0x370] sm:$0xff]
  %v279 = vld [vmem:[%s1 + $0x378] sm:$0xff]
  %v280 = vld [vmem:[%s1 + $0x380] sm:$0xff]
  %v281 = vld [vmem:[%s1 + $0x388] sm:$0xff]
  %v282 = vld [vmem:[%s1 + $0x390] sm:$0xff]
  %v283 = vld [vmem:[%s1 + $0x398] sm:$0xff]
  %v284 = vld [vmem:[%s1 + $0x3a0] sm:$0xff]
  %v285 = vld [vmem:[%s1 + $0x3a8] sm:$0xff]
  %v286 = vld [vmem:[%s1 + $0x3b0] sm:$0xff]
  %v287 = vld [vmem:[%s1 + $0x3b8] sm:$0xff]
  %v288 = vld [vmem:[%s1 + $0x3c0] sm:$0xff]
  %v289 = vld [vmem:[%s1 + $0x3c8] sm:$0xff]
  %v290 = vld [vmem:[%s1 + $0x3d0] sm:$0xff]
  %v291 = vld [vmem:[%s1 + $0x3d8] sm:$0xff]
  %v292 = vld [vmem:[%s1 + $0x3e0] sm:$0xff]
  %v293 = vld [vmem:[%s1 + $0x3e8] sm:$0xff]
  %v294 = vld [vmem:[%s1 + $0x3f0] sm:$0xff]
  %v295 = vld [vmem:[%s1 + $0x3f8] sm:$0xff]
  %296 = vmatprep.subr.mxu0 %v169
  %297 = vmatpush1.msra.mxu0 %v168
  %298 = vmatprep.subr.mxu0 %v171
  %299 = vmatpush1.msra.mxu0 %v170
  %300 = vmatprep.subr.mxu0 %v173
  %301 = vmatpush1.msra.mxu0 %v172
  %302 = vmatprep.subr.mxu0 %v175
  %303 = vmatpush1.msra.mxu0 %v174
  %304 = vmatprep.subr.mxu0 %v177
  %305 = vmatpush1.msra.mxu0 %v176
  %306 = vmatprep.subr.mxu0 %v179
  %307 = vmatpush1.msra.mxu0 %v178
  %308 = vmatprep.subr.mxu0 %v181
  %309 = vmatpush1.msra.mxu0 %v180
  %310 = vmatprep.subr.mxu0 %v183
  %311 = vmatpush1.msra.mxu0 %v182
  %312 = vmatprep.subr.mxu0 %v185
  %313 = vmatpush1.msra.mxu0 %v184
  %314 = vmatprep.subr.mxu0 %v187
  %315 = vmatpush1.msra.mxu0 %v186
  %316 = vmatprep.subr.mxu0 %v189
  %317 = vmatpush1.msra.mxu0 %v188
  %318 = vmatprep.subr.mxu0 %v191
  %319 = vmatpush1.msra.mxu0 %v190
  %320 = vmatprep.subr.mxu0 %v193
  %321 = vmatpush1.msra.mxu0 %v192
  %322 = vmatprep.subr.mxu0 %v195
  %323 = vmatpush1.msra.mxu0 %v194
  %324 = vmatprep.subr.mxu0 %v197
  %325 = vmatpush1.msra.mxu0 %v196
  %326 = vmatprep.subr.mxu0 %v199
  %327 = vmatpush1.msra.mxu0 %v198
  %328 = vmatprep.subr.mxu0 %v201
  %329 = vmatpush1.msra.mxu0 %v200
  %330 = vmatprep.subr.mxu0 %v203
  %331 = vmatpush1.msra.mxu0 %v202
  %332 = vmatprep.subr.mxu0 %v205
  %333 = vmatpush1.msra.mxu0 %v204
  %334 = vmatprep.subr.mxu0 %v207
  %335 = vmatpush1.msra.mxu0 %v206
  %336 = vmatprep.subr.mxu0 %v209
  %337 = vmatpush1.msra.mxu0 %v208
  %338 = vmatprep.subr.mxu0 %v211
  %339 = vmatpush1.msra.mxu0 %v210
  %340 = vmatprep.subr.mxu0 %v213
  %341 = vmatpush1.msra.mxu0 %v212
  %342 = vmatprep.subr.mxu0 %v215
  %343 = vmatpush1.msra.mxu0 %v214
  %344 = vmatprep.subr.mxu0 %v217
  %345 = vmatpush1.msra.mxu0 %v216
  %346 = vmatprep.subr.mxu0 %v219
  %347 = vmatpush1.msra.mxu0 %v218
  %348 = vmatprep.subr.mxu0 %v221
  %349 = vmatpush1.msra.mxu0 %v220
  %350 = vmatprep.subr.mxu0 %v223
  %351 = vmatpush1.msra.mxu0 %v222
  %352 = vmatprep.subr.mxu0 %v225
  %353 = vmatpush1.msra.mxu0 %v224
  %354 = vmatprep.subr.mxu0 %v227
  %355 = vmatpush1.msra.mxu0 %v226
  %356 = vmatprep.subr.mxu0 %v229
  %357 = vmatpush1.msra.mxu0 %v228
  %358 = vmatprep.subr.mxu0 %v231
  %359 = vmatpush1.msra.mxu0 %v230
  %360 = vmatprep.mubr.f32.mxu0 %v157
  %361 = vmatmul.mubr.f32.gmra.mrb[0].mxu0 %v156
  %v362 = vpop.f32.mrb[0].mxu0
  %v363 = vadd.f32 0.0, %v362
  %v364 = vpop.f32.mrb[0].mxu0
  %v365 = vadd.f32 0.0, %v364
  %366 = vdwg.mxu0
  %367 = vmatprep.subr.mxu0 %v233
  %368 = vmatpush1.msra.mxu0 %v232
  %369 = vmatprep.subr.mxu0 %v235
  %370 = vmatpush1.msra.mxu0 %v234
  %371 = vmatprep.subr.mxu0 %v237
  %372 = vmatpush1.msra.mxu0 %v236
  %373 = vmatprep.subr.mxu0 %v239
  %374 = vmatpush1.msra.mxu0 %v238
  %375 = vmatprep.subr.mxu0 %v241
  %376 = vmatpush1.msra.mxu0 %v240
  %377 = vmatprep.subr.mxu0 %v243
  %378 = vmatpush1.msra.mxu0 %v242
  %379 = vmatprep.subr.mxu0 %v245
  %380 = vmatpush1.msra.mxu0 %v244
  %381 = vmatprep.subr.mxu0 %v247
  %382 = vmatpush1.msra.mxu0 %v246
  %383 = vmatprep.subr.mxu0 %v249
  %384 = vmatpush1.msra.mxu0 %v248
  %385 = vmatprep.subr.mxu0 %v251
  %386 = vmatpush1.msra.mxu0 %v250
  %387 = vmatprep.subr.mxu0 %v253
  %388 = vmatpush1.msra.mxu0 %v252
  %389 = vmatprep.subr.mxu0 %v255
  %390 = vmatpush1.msra.mxu0 %v254
  %391 = vmatprep.subr.mxu0 %v257
  %392 = vmatpush1.msra.mxu0 %v256
  %393 = vmatprep.subr.mxu0 %v259
  %394 = vmatpush1.msra.mxu0 %v258
  %395 = vmatprep.subr.mxu0 %v261
  %396 = vmatpush1.msra.mxu0 %v260
  %397 = vmatprep.subr.mxu0 %v263
  %398 = vmatpush1.msra.mxu0 %v262
  %399 = vmatprep.subr.mxu0 %v265
  %400 = vmatpush1.msra.mxu0 %v264
  %401 = vmatprep.subr.mxu0 %v267
  %402 = vmatpush1.msra.mxu0 %v266
  %403 = vmatprep.subr.mxu0 %v269
  %404 = vmatpush1.msra.mxu0 %v268
  %405 = vmatprep.subr.mxu0 %v271
  %406 = vmatpush1.msra.mxu0 %v270
  %407 = vmatprep.subr.mxu0 %v273
  %408 = vmatpush1.msra.mxu0 %v272
  %409 = vmatprep.subr.mxu0 %v275
  %410 = vmatpush1.msra.mxu0 %v274
  %411 = vmatprep.subr.mxu0 %v277
  %412 = vmatpush1.msra.mxu0 %v276
  %413 = vmatprep.subr.mxu0 %v279
  %414 = vmatpush1.msra.mxu0 %v278
  %415 = vmatprep.subr.mxu0 %v281
  %416 = vmatpush1.msra.mxu0 %v280
  %417 = vmatprep.subr.mxu0 %v283
  %418 = vmatpush1.msra.mxu0 %v282
  %419 = vmatprep.subr.mxu0 %v285
  %420 = vmatpush1.msra.mxu0 %v284
  %421 = vmatprep.subr.mxu0 %v287
  %422 = vmatpush1.msra.mxu0 %v286
  %423 = vmatprep.subr.mxu0 %v289
  %424 = vmatpush1.msra.mxu0 %v288
  %425 = vmatprep.subr.mxu0 %v291
  %426 = vmatpush1.msra.mxu0 %v290
  %427 = vmatprep.subr.mxu0 %v293
  %428 = vmatpush1.msra.mxu0 %v292
  %429 = vmatprep.subr.mxu0 %v295
  %430 = vmatpush1.msra.mxu0 %v294
  %431 = vmatprep.mubr.f32.mxu0 %v165
  %432 = vmatmul.mubr.f32.gmra.mrb[0].mxu0 %v164
  %v433 = vpop.f32.mrb[0].mxu0
  %v434 = vadd.f32 %v363, %v433
  %v435 = vpop.f32.mrb[0].mxu0
  %v436 = vadd.f32 %v365, %v435
  %437 = vdwg.mxu0
  %vm438 = vcmask 1041408
  %v439 = vsel %vm438, %v434, -inf
  %v440 = vsel %vm438, %v436, -inf
  %v441 = vmax.f32 %v439, %v440
  %442 = vmax.xlane.f32.xlu0 %v441
  %v443 = vpop.xlane.xlu0 %442
  %v444 = vsub.f32 %v434, %v443
  %v445 = vsub.f32 %v436, %v443
  %v446 = vmul.f32 %v444, 1.442695
  %v447 = vpow.pop %v446
  %v448 = vmul.f32 %v445, 1.442695
  %v449 = vpow.pop %v448
  %450 = vmatprep.subr.mxu0 0.0
  %451 = vmatpush1.msra.mxu0 %v27
  %452 = vmatprep.subr.mxu0 0.0
  %453 = vmatpush1.msra.mxu0 %v28
  %454 = vmatprep.subr.mxu0 0.0
  %455 = vmatpush1.msra.mxu0 %v29
  %456 = vmatprep.subr.mxu0 0.0
  %457 = vmatpush1.msra.mxu0 %v30
  %458 = vmatprep.subr.mxu0 0.0
  %459 = vmatpush1.msra.mxu0 %v31
  %460 = vmatprep.subr.mxu0 0.0
  %461 = vmatpush1.msra.mxu0 %v32
  %462 = vmatprep.subr.mxu0 0.0
  %463 = vmatpush1.msra.mxu0 %v33
  %464 = vmatprep.subr.mxu0 0.0
  %465 = vmatpush1.msra.mxu0 %v34
  %466 = vmatprep.subr.mxu0 0.0
  %467 = vmatpush1.msra.mxu0 %v35
  %468 = vmatprep.subr.mxu0 0.0
  %469 = vmatpush1.msra.mxu0 %v36
  %470 = vmatprep.subr.mxu0 0.0
  %471 = vmatpush1.msra.mxu0 %v37
  %472 = vmatprep.subr.mxu0 0.0
  %473 = vmatpush1.msra.mxu0 %v38
  %474 = vmatprep.subr.mxu0 0.0
  %475 = vmatpush1.msra.mxu0 %v39
  %476 = vmatprep.subr.mxu0 0.0
  %477 = vmatpush1.msra.mxu0 %v40
  %478 = vmatprep.subr.mxu0 0.0
  %479 = vmatpush1.msra.mxu0 %v41
  %480 = vmatprep.subr.mxu0 0.0
  %481 = vmatpush1.msra.mxu0 %v42
  %482 = vmatprep.subr.mxu0 0.0
  %483 = vmatpush1.msra.mxu0 %v43
  %484 = vmatprep.subr.mxu0 0.0
  %485 = vmatpush1.msra.mxu0 %v44
  %486 = vmatprep.subr.mxu0 0.0
  %487 = vmatpush1.msra.mxu0 %v45
  %488 = vmatprep.subr.mxu0 0.0
  %489 = vmatpush1.msra.mxu0 %v46
  %490 = vmatprep.subr.mxu0 0.0
  %491 = vmatpush1.msra.mxu0 %v47
  %492 = vmatprep.subr.mxu0 0.0
  %493 = vmatpush1.msra.mxu0 %v48
  %494 = vmatprep.subr.mxu0 0.0
  %495 = vmatpush1.msra.mxu0 %v49
  %496 = vmatprep.subr.mxu0 0.0
  %497 = vmatpush1.msra.mxu0 %v50
  %498 = vmatprep.subr.mxu0 0.0
  %499 = vmatpush1.msra.mxu0 %v51
  %500 = vmatprep.subr.mxu0 0.0
  %501 = vmatpush1.msra.mxu0 %v52
  %502 = vmatprep.subr.mxu0 0.0
  %503 = vmatpush1.msra.mxu0 %v53
  %504 = vmatprep.subr.mxu0 0.0
  %505 = vmatpush1.msra.mxu0 %v54
  %506 = vmatprep.subr.mxu0 0.0
  %507 = vmatpush1.msra.mxu0 %v55
  %508 = vmatprep.subr.mxu0 0.0
  %509 = vmatpush1.msra.mxu0 %v56
  %510 = vmatprep.subr.mxu0 0.0
  %511 = vmatpush1.msra.mxu0 %v57
  %512 = vmatprep.subr.mxu0 0.0
  %513 = vmatpush1.msra.mxu0 %v58
  %514 = vmatprep.mubr.f32.mxu0 %v449
  %515 = vmatmul.mubr.f32.gmra.mrb[0].mxu0 %v447
  %v516 = vpop.f32.mrb[0].mxu0
  %v517 = vadd.f32 0.0, %v516
  %v518 = vpop.f32.mrb[0].mxu0
  %519 = vdwg.mxu0
  %v520 = vrcp.pop %v517
  %v521 = vmul.f32 1.0, %v520
  %522 = vmatprep.subr.mxu0 0.0
  %523 = vmatpush1.msra.mxu0 %v59
  %524 = vmatprep.subr.mxu0 0.0
  %525 = vmatpush1.msra.mxu0 %v60
  %526 = vmatprep.subr.mxu0 0.0
  %527 = vmatpush1.msra.mxu0 %v61
  %528 = vmatprep.subr.mxu0 0.0
  %529 = vmatpush1.msra.mxu0 %v62
  %530 = vmatprep.subr.mxu0 0.0
  %531 = vmatpush1.msra.mxu0 %v63
  %532 = vmatprep.subr.mxu0 0.0
  %533 = vmatpush1.msra.mxu0 %v64
  %534 = vmatprep.subr.mxu0 0.0
  %535 = vmatpush1.msra.mxu0 %v65
  %536 = vmatprep.subr.mxu0 0.0
  %537 = vmatpush1.msra.mxu0 %v66
  %538 = vmatprep.subr.mxu0 0.0
  %539 = vmatpush1.msra.mxu0 %v67
  %540 = vmatprep.subr.mxu0 0.0
  %541 = vmatpush1.msra.mxu0 %v68
  %542 = vmatprep.subr.mxu0 0.0
  %543 = vmatpush1.msra.mxu0 %v69
  %544 = vmatprep.subr.mxu0 0.0
  %545 = vmatpush1.msra.mxu0 %v70
  %546 = vmatprep.subr.mxu0 0.0
  %547 = vmatpush1.msra.mxu0 %v71
  %548 = vmatprep.subr.mxu0 0.0
  %549 = vmatpush1.msra.mxu0 %v72
  %550 = vmatprep.subr.mxu0 0.0
  %551 = vmatpush1.msra.mxu0 %v73
  %552 = vmatprep.subr.mxu0 0.0
  %553 = vmatpush1.msra.mxu0 %v74
  %554 = vmatprep.subr.mxu0 0.0
  %555 = vmatpush1.msra.mxu0 %v75
  %556 = vmatprep.subr.mxu0 0.0
  %557 = vmatpush1.msra.mxu0 %v76
  %558 = vmatprep.subr.mxu0 0.0
  %559 = vmatpush1.msra.mxu0 %v77
  %560 = vmatprep.subr.mxu0 0.0
  %561 = vmatpush1.msra.mxu0 %v78
  %562 = vmatprep.subr.mxu0 0.0
  %563 = vmatpush1.msra.mxu0 %v79
  %564 = vmatprep.subr.mxu0 0.0
  %565 = vmatpush1.msra.mxu0 %v80
  %566 = vmatprep.subr.mxu0 0.0
  %567 = vmatpush1.msra.mxu0 %v81
  %568 = vmatprep.subr.mxu0 0.0
  %569 = vmatpush1.msra.mxu0 %v82
  %570 = vmatprep.subr.mxu0 0.0
  %571 = vmatpush1.msra.mxu0 %v83
  %572 = vmatprep.subr.mxu0 0.0
  %573 = vmatpush1.msra.mxu0 %v84
  %574 = vmatprep.subr.mxu0 0.0
  %575 = vmatpush1.msra.mxu0 %v85
  %576 = vmatprep.subr.mxu0 0.0
  %577 = vmatpush1.msra.mxu0 %v86
  %578 = vmatprep.subr.mxu0 0.0
  %579 = vmatpush1.msra.mxu0 %v87
  %580 = vmatprep.subr.mxu0 0.0
  %581 = vmatpush1.msra.mxu0 %v88
  %582 = vmatprep.subr.mxu0 0.0
  %583 = vmatpush1.msra.mxu0 %v89
  %584 = vmatprep.subr.mxu0 0.0
  %585 = vmatpush1.msra.mxu0 %v90
  %586 = vmatprep.mubr.f32.mxu0 %v449
  %587 = vmatmul.mubr.f32.gmra.mrb[0].mxu0 %v447
  %v588 = vpop.f32.mrb[0].mxu0
  %v589 = vadd.f32 0.0, %v588
  %v590 = vpop.f32.mrb[0].mxu0
  %591 = vdwg.mxu0
  %v592 = vrcp.pop %v589
  %v593 = vmul.f32 1.0, %v592
  %vm594 = vcmask 130048
  %v596 = vsel %vm594, %v521, 0
  %598 = vmatprep.subr.mxu0 %v92
  %599 = vmatpush1.msra.mxu0 %v91
  %600 = vmatprep.subr.mxu0 %v94
  %601 = vmatpush1.msra.mxu0 %v93
  %602 = vmatprep.subr.mxu0 0.0
  %603 = vmatpush1.msra.mxu0 0.0
  %604 = vmatprep.subr.mxu0 0.0
  %605 = vmatpush1.msra.mxu0 0.0
  %606 = vmatprep.subr.mxu0 0.0
  %607 = vmatpush1.msra.mxu0 0.0
  %608 = vmatprep.subr.mxu0 0.0
  %609 = vmatpush1.msra.mxu0 0.0
  %610 = vmatprep.subr.mxu0 0.0
  %611 = vmatpush1.msra.mxu0 0.0
  %612 = vmatprep.subr.mxu0 0.0
  %613 = vmatpush1.msra.mxu0 0.0
  %614 = vmatprep.subr.mxu0 0.0
  %615 = vmatpush1.msra.mxu0 0.0
  %616 = vmatprep.subr.mxu0 0.0
  %617 = vmatpush1.msra.mxu0 0.0
  %618 = vmatprep.subr.mxu0 0.0
  %619 = vmatpush1.msra.mxu0 0.0
  %620 = vmatprep.subr.mxu0 0.0
  %621 = vmatpush1.msra.mxu0 0.0
  %622 = vmatprep.subr.mxu0 0.0
  %623 = vmatpush1.msra.mxu0 0.0
  %624 = vmatprep.subr.mxu0 0.0
  %625 = vmatpush1.msra.mxu0 0.0
  %626 = vmatprep.subr.mxu0 0.0
  %627 = vmatpush1.msra.mxu0 0.0
  %628 = vmatprep.subr.mxu0 0.0
  %629 = vmatpush1.msra.mxu0 0.0
  %630 = vmatprep.subr.mxu0 0.0
  %631 = vmatpush1.msra.mxu0 0.0
  %632 = vmatprep.subr.mxu0 0.0
  %633 = vmatpush1.msra.mxu0 0.0
  %634 = vmatprep.subr.mxu0 0.0
  %635 = vmatpush1.msra.mxu0 0.0
  %636 = vmatprep.subr.mxu0 0.0
  %637 = vmatpush1.msra.mxu0 0.0
  %638 = vmatprep.subr.mxu0 0.0
  %639 = vmatpush1.msra.mxu0 0.0
  %640 = vmatprep.subr.mxu0 0.0
  %641 = vmatpush1.msra.mxu0 0.0
  %642 = vmatprep.subr.mxu0 0.0
  %643 = vmatpush1.msra.mxu0 0.0
  %644 = vmatprep.subr.mxu0 0.0
  %645 = vmatpush1.msra.mxu0 0.0
  %646 = vmatprep.subr.mxu0 0.0
  %647 = vmatpush1.msra.mxu0 0.0
  %648 = vmatprep.subr.mxu0 0.0
  %649 = vmatpush1.msra.mxu0 0.0
  %650 = vmatprep.subr.mxu0 0.0
  %651 = vmatpush1.msra.mxu0 0.0
  %652 = vmatprep.subr.mxu0 0.0
  %653 = vmatpush1.msra.mxu0 0.0
  %654 = vmatprep.subr.mxu0 0.0
  %655 = vmatpush1.msra.mxu0 0.0
  %656 = vmatprep.subr.mxu0 0.0
  %657 = vmatpush1.msra.mxu0 0.0
  %658 = vmatprep.subr.mxu0 0.0
  %659 = vmatpush1.msra.mxu0 0.0
  %660 = vmatprep.subr.mxu0 0.0
  %661 = vmatpush1.msra.mxu0 0.0
  %662 = vmatprep.mubr.f32.mxu0 0.0
  %663 = vmatmul.mubr.f32.gmra.mrb[0].mxu0 %v596
  %v664 = vpop.f32.mrb[0].mxu0
  %v665 = vadd.f32 0.0, %v664
  %v666 = vpop.f32.mrb[0].mxu0
  %v667 = vadd.f32 0.0, %v666
  %668 = vdwg.mxu0
  %v669 = vmul.f32 %v447, %v665
  %v670 = vmul.f32 %v449, %v667
  %v672 = vsel %vm594, %v593, 0
  %674 = vmatprep.subr.mxu0 %v96
  %675 = vmatpush1.msra.mxu0 %v95
  %676 = vmatprep.subr.mxu0 %v98
  %677 = vmatpush1.msra.mxu0 %v97
  %678 = vmatprep.subr.mxu0 0.0
  %679 = vmatpush1.msra.mxu0 0.0
  %680 = vmatprep.subr.mxu0 0.0
  %681 = vmatpush1.msra.mxu0 0.0
  %682 = vmatprep.subr.mxu0 0.0
  %683 = vmatpush1.msra.mxu0 0.0
  %684 = vmatprep.subr.mxu0 0.0
  %685 = vmatpush1.msra.mxu0 0.0
  %686 = vmatprep.subr.mxu0 0.0
  %687 = vmatpush1.msra.mxu0 0.0
  %688 = vmatprep.subr.mxu0 0.0
  %689 = vmatpush1.msra.mxu0 0.0
  %690 = vmatprep.subr.mxu0 0.0
  %691 = vmatpush1.msra.mxu0 0.0
  %692 = vmatprep.subr.mxu0 0.0
  %693 = vmatpush1.msra.mxu0 0.0
  %694 = vmatprep.subr.mxu0 0.0
  %695 = vmatpush1.msra.mxu0 0.0
  %696 = vmatprep.subr.mxu0 0.0
  %697 = vmatpush1.msra.mxu0 0.0
  %698 = vmatprep.subr.mxu0 0.0
  %699 = vmatpush1.msra.mxu0 0.0
  %700 = vmatprep.subr.mxu0 0.0
  %701 = vmatpush1.msra.mxu0 0.0
  %702 = vmatprep.subr.mxu0 0.0
  %703 = vmatpush1.msra.mxu0 0.0
  %704 = vmatprep.subr.mxu0 0.0
  %705 = vmatpush1.msra.mxu0 0.0
  %706 = vmatprep.subr.mxu0 0.0
  %707 = vmatpush1.msra.mxu0 0.0
  %708 = vmatprep.subr.mxu0 0.0
  %709 = vmatpush1.msra.mxu0 0.0
  %710 = vmatprep.subr.mxu0 0.0
  %711 = vmatpush1.msra.mxu0 0.0
  %712 = vmatprep.subr.mxu0 0.0
  %713 = vmatpush1.msra.mxu0 0.0
  %714 = vmatprep.subr.mxu0 0.0
  %715 = vmatpush1.msra.mxu0 0.0
  %716 = vmatprep.subr.mxu0 0.0
  %717 = vmatpush1.msra.mxu0 0.0
  %718 = vmatprep.subr.mxu0 0.0
  %719 = vmatpush1.msra.mxu0 0.0
  %720 = vmatprep.subr.mxu0 0.0
  %721 = vmatpush1.msra.mxu0 0.0
  %722 = vmatprep.subr.mxu0 0.0
  %723 = vmatpush1.msra.mxu0 0.0
  %724 = vmatprep.subr.mxu0 0.0
  %725 = vmatpush1.msra.mxu0 0.0
  %726 = vmatprep.subr.mxu0 0.0
  %727 = vmatpush1.msra.mxu0 0.0
  %728 = vmatprep.subr.mxu0 0.0
  %729 = vmatpush1.msra.mxu0 0.0
  %730 = vmatprep.subr.mxu0 0.0
  %731 = vmatpush1.msra.mxu0 0.0
  %732 = vmatprep.subr.mxu0 0.0
  %733 = vmatpush1.msra.mxu0 0.0
  %734 = vmatprep.subr.mxu0 0.0
  %735 = vmatpush1.msra.mxu0 0.0
  %736 = vmatprep.subr.mxu0 0.0
  %737 = vmatpush1.msra.mxu0 0.0
  %738 = vmatprep.mubr.f32.mxu0 0.0
  %739 = vmatmul.mubr.f32.gmra.mrb[0].mxu0 %v672
  %v740 = vpop.f32.mrb[0].mxu0
  %v741 = vadd.f32 0.0, %v740
  %v742 = vpop.f32.mrb[0].mxu0
  %v743 = vadd.f32 0.0, %v742
  %744 = vdwg.mxu0
  %v745 = vmul.f32 %v447, %v741
  %v746 = vmul.f32 %v449, %v743
  %747 = vmatprep.subr.mxu0 0.0
  %748 = vmatpush1.msra.mxu0 %v27
  %749 = vmatprep.subr.mxu0 0.0
  %750 = vmatpush1.msra.mxu0 %v28
  %751 = vmatprep.subr.mxu0 0.0
  %752 = vmatpush1.msra.mxu0 %v29
  %753 = vmatprep.subr.mxu0 0.0
  %754 = vmatpush1.msra.mxu0 %v30
  %755 = vmatprep.subr.mxu0 0.0
  %756 = vmatpush1.msra.mxu0 %v31
  %757 = vmatprep.subr.mxu0 0.0
  %758 = vmatpush1.msra.mxu0 %v32
  %759 = vmatprep.subr.mxu0 0.0
  %760 = vmatpush1.msra.mxu0 %v33
  %761 = vmatprep.subr.mxu0 0.0
  %762 = vmatpush1.msra.mxu0 %v34
  %763 = vmatprep.subr.mxu0 0.0
  %764 = vmatpush1.msra.mxu0 %v35
  %765 = vmatprep.subr.mxu0 0.0
  %766 = vmatpush1.msra.mxu0 %v36
  %767 = vmatprep.subr.mxu0 0.0
  %768 = vmatpush1.msra.mxu0 %v37
  %769 = vmatprep.subr.mxu0 0.0
  %770 = vmatpush1.msra.mxu0 %v38
  %771 = vmatprep.subr.mxu0 0.0
  %772 = vmatpush1.msra.mxu0 %v39
  %773 = vmatprep.subr.mxu0 0.0
  %774 = vmatpush1.msra.mxu0 %v40
  %775 = vmatprep.subr.mxu0 0.0
  %776 = vmatpush1.msra.mxu0 %v41
  %777 = vmatprep.subr.mxu0 0.0
  %778 = vmatpush1.msra.mxu0 %v42
  %779 = vmatprep.subr.mxu0 0.0
  %780 = vmatpush1.msra.mxu0 %v43
  %781 = vmatprep.subr.mxu0 0.0
  %782 = vmatpush1.msra.mxu0 %v44
  %783 = vmatprep.subr.mxu0 0.0
  %784 = vmatpush1.msra.mxu0 %v45
  %785 = vmatprep.subr.mxu0 0.0
  %786 = vmatpush1.msra.mxu0 %v46
  %787 = vmatprep.subr.mxu0 0.0
  %788 = vmatpush1.msra.mxu0 %v47
  %789 = vmatprep.subr.mxu0 0.0
  %790 = vmatpush1.msra.mxu0 %v48
  %791 = vmatprep.subr.mxu0 0.0
  %792 = vmatpush1.msra.mxu0 %v49
  %793 = vmatprep.subr.mxu0 0.0
  %794 = vmatpush1.msra.mxu0 %v50
  %795 = vmatprep.subr.mxu0 0.0
  %796 = vmatpush1.msra.mxu0 %v51
  %797 = vmatprep.subr.mxu0 0.0
  %798 = vmatpush1.msra.mxu0 %v52
  %799 = vmatprep.subr.mxu0 0.0
  %800 = vmatpush1.msra.mxu0 %v53
  %801 = vmatprep.subr.mxu0 0.0
  %802 = vmatpush1.msra.mxu0 %v54
  %803 = vmatprep.subr.mxu0 0.0
  %804 = vmatpush1.msra.mxu0 %v55
  %805 = vmatprep.subr.mxu0 0.0
  %806 = vmatpush1.msra.mxu0 %v56
  %807 = vmatprep.subr.mxu0 0.0
  %808 = vmatpush1.msra.mxu0 %v57
  %809 = vmatprep.subr.mxu0 0.0
  %810 = vmatpush1.msra.mxu0 %v58
  %811 = vmatprep.mubr.f32.mxu0 %v24
  %812 = vmatmul.mubr.f32.gmra.mrb[0].mxu0 %v23
  %v813 = vpop.f32.mrb[0].mxu0
  %v814 = vadd.f32 0.0, %v813
  %v815 = vpop.f32.mrb[0].mxu0
  %816 = vmatprep.mubr.f32.mxu0 %v26
  %817 = vmatmul.mubr.f32.gmra.mrb[0].mxu0 %v25
  %v818 = vpop.f32.mrb[0].mxu0
  %v819 = vadd.f32 0.0, %v818
  %v820 = vpop.f32.mrb[0].mxu0
  %821 = vdwg.mxu0
  %v822 = vmul.f32 %v814, 0.0625
  %v823 = vmul.f32 %v819, 0.0625
  %v825 = vsel %vm594, %v822, 0
  %v828 = vsel %vm594, %v823, 0
  %830 = vmatprep.subr.mxu0 %v92
  %831 = vmatpush1.msra.mxu0 %v91
  %832 = vmatprep.subr.mxu0 %v94
  %833 = vmatpush1.msra.mxu0 %v93
  %834 = vmatprep.subr.mxu0 0.0
  %835 = vmatpush1.msra.mxu0 0.0
  %836 = vmatprep.subr.mxu0 0.0
  %837 = vmatpush1.msra.mxu0 0.0
  %838 = vmatprep.subr.mxu0 0.0
  %839 = vmatpush1.msra.mxu0 0.0
  %840 = vmatprep.subr.mxu0 0.0
  %841 = vmatpush1.msra.mxu0 0.0
  %842 = vmatprep.subr.mxu0 0.0
  %843 = vmatpush1.msra.mxu0 0.0
  %844 = vmatprep.subr.mxu0 0.0
  %845 = vmatpush1.msra.mxu0 0.0
  %846 = vmatprep.subr.mxu0 0.0
  %847 = vmatpush1.msra.mxu0 0.0
  %848 = vmatprep.subr.mxu0 0.0
  %849 = vmatpush1.msra.mxu0 0.0
  %850 = vmatprep.subr.mxu0 0.0
  %851 = vmatpush1.msra.mxu0 0.0
  %852 = vmatprep.subr.mxu0 0.0
  %853 = vmatpush1.msra.mxu0 0.0
  %854 = vmatprep.subr.mxu0 0.0
  %855 = vmatpush1.msra.mxu0 0.0
  %856 = vmatprep.subr.mxu0 0.0
  %857 = vmatpush1.msra.mxu0 0.0
  %858 = vmatprep.subr.mxu0 0.0
  %859 = vmatpush1.msra.mxu0 0.0
  %860 = vmatprep.subr.mxu0 0.0
  %861 = vmatpush1.msra.mxu0 0.0
  %862 = vmatprep.subr.mxu0 0.0
  %863 = vmatpush1.msra.mxu0 0.0
  %864 = vmatprep.subr.mxu0 0.0
  %865 = vmatpush1.msra.mxu0 0.0
  %866 = vmatprep.subr.mxu0 0.0
  %867 = vmatpush1.msra.mxu0 0.0
  %868 = vmatprep.subr.mxu0 0.0
  %869 = vmatpush1.msra.mxu0 0.0
  %870 = vmatprep.subr.mxu0 0.0
  %871 = vmatpush1.msra.mxu0 0.0
  %872 = vmatprep.subr.mxu0 0.0
  %873 = vmatpush1.msra.mxu0 0.0
  %874 = vmatprep.subr.mxu0 0.0
  %875 = vmatpush1.msra.mxu0 0.0
  %876 = vmatprep.subr.mxu0 0.0
  %877 = vmatpush1.msra.mxu0 0.0
  %878 = vmatprep.subr.mxu0 0.0
  %879 = vmatpush1.msra.mxu0 0.0
  %880 = vmatprep.subr.mxu0 0.0
  %881 = vmatpush1.msra.mxu0 0.0
  %882 = vmatprep.subr.mxu0 0.0
  %883 = vmatpush1.msra.mxu0 0.0
  %884 = vmatprep.subr.mxu0 0.0
  %885 = vmatpush1.msra.mxu0 0.0
  %886 = vmatprep.subr.mxu0 0.0
  %887 = vmatpush1.msra.mxu0 0.0
  %888 = vmatprep.subr.mxu0 0.0
  %889 = vmatpush1.msra.mxu0 0.0
  %890 = vmatprep.subr.mxu0 0.0
  %891 = vmatpush1.msra.mxu0 0.0
  %892 = vmatprep.subr.mxu0 0.0
  %893 = vmatpush1.msra.mxu0 0.0
  %894 = vmatprep.mubr.f32.mxu0 0.0
  %895 = vmatmul.mubr.f32.gmra.mrb[0].mxu0 %v825
  %v896 = vpop.f32.mrb[0].mxu0
  %v897 = vadd.f32 0.0, %v896
  %v898 = vpop.f32.mrb[0].mxu0
  %v899 = vadd.f32 0.0, %v898
  %900 = vmatprep.mubr.f32.mxu0 0.0
  %901 = vmatmul.mubr.f32.gmra.mrb[0].mxu0 %v828
  %v902 = vpop.f32.mrb[0].mxu0
  %v903 = vadd.f32 0.0, %v902
  %v904 = vpop.f32.mrb[0].mxu0
  %v905 = vadd.f32 0.0, %v904
  %906 = vdwg.mxu0
  %907 = vmatprep.subr.mxu0 0.0
  %908 = vmatpush1.msra.mxu0 %v59
  %909 = vmatprep.subr.mxu0 0.0
  %910 = vmatpush1.msra.mxu0 %v60
  %911 = vmatprep.subr.mxu0 0.0
  %912 = vmatpush1.msra.mxu0 %v61
  %913 = vmatprep.subr.mxu0 0.0
  %914 = vmatpush1.msra.mxu0 %v62
  %915 = vmatprep.subr.mxu0 0.0
  %916 = vmatpush1.msra.mxu0 %v63
  %917 = vmatprep.subr.mxu0 0.0
  %918 = vmatpush1.msra.mxu0 %v64
  %919 = vmatprep.subr.mxu0 0.0
  %920 = vmatpush1.msra.mxu0 %v65
  %921 = vmatprep.subr.mxu0 0.0
  %922 = vmatpush1.msra.mxu0 %v66
  %923 = vmatprep.subr.mxu0 0.0
  %924 = vmatpush1.msra.mxu0 %v67
  %925 = vmatprep.subr.mxu0 0.0
  %926 = vmatpush1.msra.mxu0 %v68
  %927 = vmatprep.subr.mxu0 0.0
  %928 = vmatpush1.msra.mxu0 %v69
  %929 = vmatprep.subr.mxu0 0.0
  %930 = vmatpush1.msra.mxu0 %v70
  %931 = vmatprep.subr.mxu0 0.0
  %932 = vmatpush1.msra.mxu0 %v71
  %933 = vmatprep.subr.mxu0 0.0
  %934 = vmatpush1.msra.mxu0 %v72
  %935 = vmatprep.subr.mxu0 0.0
  %936 = vmatpush1.msra.mxu0 %v73
  %937 = vmatprep.subr.mxu0 0.0
  %938 = vmatpush1.msra.mxu0 %v74
  %939 = vmatprep.subr.mxu0 0.0
  %940 = vmatpush1.msra.mxu0 %v75
  %941 = vmatprep.subr.mxu0 0.0
  %942 = vmatpush1.msra.mxu0 %v76
  %943 = vmatprep.subr.mxu0 0.0
  %944 = vmatpush1.msra.mxu0 %v77
  %945 = vmatprep.subr.mxu0 0.0
  %946 = vmatpush1.msra.mxu0 %v78
  %947 = vmatprep.subr.mxu0 0.0
  %948 = vmatpush1.msra.mxu0 %v79
  %949 = vmatprep.subr.mxu0 0.0
  %950 = vmatpush1.msra.mxu0 %v80
  %951 = vmatprep.subr.mxu0 0.0
  %952 = vmatpush1.msra.mxu0 %v81
  %953 = vmatprep.subr.mxu0 0.0
  %954 = vmatpush1.msra.mxu0 %v82
  %955 = vmatprep.subr.mxu0 0.0
  %956 = vmatpush1.msra.mxu0 %v83
  %957 = vmatprep.subr.mxu0 0.0
  %958 = vmatpush1.msra.mxu0 %v84
  %959 = vmatprep.subr.mxu0 0.0
  %960 = vmatpush1.msra.mxu0 %v85
  %961 = vmatprep.subr.mxu0 0.0
  %962 = vmatpush1.msra.mxu0 %v86
  %963 = vmatprep.subr.mxu0 0.0
  %964 = vmatpush1.msra.mxu0 %v87
  %965 = vmatprep.subr.mxu0 0.0
  %966 = vmatpush1.msra.mxu0 %v88
  %967 = vmatprep.subr.mxu0 0.0
  %968 = vmatpush1.msra.mxu0 %v89
  %969 = vmatprep.subr.mxu0 0.0
  %970 = vmatpush1.msra.mxu0 %v90
  %971 = vmatprep.mubr.f32.mxu0 %v24
  %972 = vmatmul.mubr.f32.gmra.mrb[0].mxu0 %v23
  %v973 = vpop.f32.mrb[0].mxu0
  %v974 = vadd.f32 0.0, %v973
  %v975 = vpop.f32.mrb[0].mxu0
  %976 = vmatprep.mubr.f32.mxu0 %v26
  %977 = vmatmul.mubr.f32.gmra.mrb[0].mxu0 %v25
  %v978 = vpop.f32.mrb[0].mxu0
  %v979 = vadd.f32 0.0, %v978
  %v980 = vpop.f32.mrb[0].mxu0
  %981 = vdwg.mxu0
  %v982 = vmul.f32 %v974, 0.0625
  %v983 = vmul.f32 %v979, 0.0625
  %v985 = vsel %vm594, %v982, 0
  %v988 = vsel %vm594, %v983, 0
  %990 = vmatprep.subr.mxu0 %v96
  %991 = vmatpush1.msra.mxu0 %v95
  %992 = vmatprep.subr.mxu0 %v98
  %993 = vmatpush1.msra.mxu0 %v97
  %994 = vmatprep.subr.mxu0 0.0
  %995 = vmatpush1.msra.mxu0 0.0
  %996 = vmatprep.subr.mxu0 0.0
  %997 = vmatpush1.msra.mxu0 0.0
  %998 = vmatprep.subr.mxu0 0.0
  %999 = vmatpush1.msra.mxu0 0.0
  %1000 = vmatprep.subr.mxu0 0.0
  %1001 = vmatpush1.msra.mxu0 0.0
  %1002 = vmatprep.subr.mxu0 0.0
  %1003 = vmatpush1.msra.mxu0 0.0
  %1004 = vmatprep.subr.mxu0 0.0
  %1005 = vmatpush1.msra.mxu0 0.0
  %1006 = vmatprep.subr.mxu0 0.0
  %1007 = vmatpush1.msra.mxu0 0.0
  %1008 = vmatprep.subr.mxu0 0.0
  %1009 = vmatpush1.msra.mxu0 0.0
  %1010 = vmatprep.subr.mxu0 0.0
  %1011 = vmatpush1.msra.mxu0 0.0
  %1012 = vmatprep.subr.mxu0 0.0
  %1013 = vmatpush1.msra.mxu0 0.0
  %1014 = vmatprep.subr.mxu0 0.0
  %1015 = vmatpush1.msra.mxu0 0.0
  %1016 = vmatprep.subr.mxu0 0.0
  %1017 = vmatpush1.msra.mxu0 0.0
  %1018 = vmatprep.subr.mxu0 0.0
  %1019 = vmatpush1.msra.mxu0 0.0
  %1020 = vmatprep.subr.mxu0 0.0
  %1021 = vmatpush1.msra.mxu0 0.0
  %1022 = vmatprep.subr.mxu0 0.0
  %1023 = vmatpush1.msra.mxu0 0.0
  %1024 = vmatprep.subr.mxu0 0.0
  %1025 = vmatpush1.msra.mxu0 0.0
  %1026 = vmatprep.subr.mxu0 0.0
  %1027 = vmatpush1.msra.mxu0 0.0
  %1028 = vmatprep.subr.mxu0 0.0
  %1029 = vmatpush1.msra.mxu0 0.0
  %1030 = vmatprep.subr.mxu0 0.0
  %1031 = vmatpush1.msra.mxu0 0.0
  %1032 = vmatprep.subr.mxu0 0.0
  %1033 = vmatpush1.msra.mxu0 0.0
  %1034 = vmatprep.subr.mxu0 0.0
  %1035 = vmatpush1.msra.mxu0 0.0
  %1036 = vmatprep.subr.mxu0 0.0
  %1037 = vmatpush1.msra.mxu0 0.0
  %1038 = vmatprep.subr.mxu0 0.0
  %1039 = vmatpush1.msra.mxu0 0.0
  %1040 = vmatprep.subr.mxu0 0.0
  %1041 = vmatpush1.msra.mxu0 0.0
  %1042 = vmatprep.subr.mxu0 0.0
  %1043 = vmatpush1.msra.mxu0 0.0
  %1044 = vmatprep.subr.mxu0 0.0
  %1045 = vmatpush1.msra.mxu0 0.0
  %1046 = vmatprep.subr.mxu0 0.0
  %1047 = vmatpush1.msra.mxu0 0.0
  %1048 = vmatprep.subr.mxu0 0.0
  %1049 = vmatpush1.msra.mxu0 0.0
  %1050 = vmatprep.subr.mxu0 0.0
  %1051 = vmatpush1.msra.mxu0 0.0
  %1052 = vmatprep.subr.mxu0 0.0
  %1053 = vmatpush1.msra.mxu0 0.0
  %1054 = vmatprep.mubr.f32.mxu0 0.0
  %1055 = vmatmul.mubr.f32.gmra.mrb[0].mxu0 %v985
  %v1056 = vpop.f32.mrb[0].mxu0
  %v1057 = vadd.f32 0.0, %v1056
  %v1058 = vpop.f32.mrb[0].mxu0
  %v1059 = vadd.f32 0.0, %v1058
  %1060 = vmatprep.mubr.f32.mxu0 0.0
  %1061 = vmatmul.mubr.f32.gmra.mrb[0].mxu0 %v988
  %v1062 = vpop.f32.mrb[0].mxu0
  %v1063 = vadd.f32 0.0, %v1062
  %v1064 = vpop.f32.mrb[0].mxu0
  %v1065 = vadd.f32 0.0, %v1064
  %1066 = vdwg.mxu0
  %v1069 = vcombine.low %v669, %v670
  %v1071 = vunpack.c.l.s4 1966171168
  %v1072 = vunpack.c.0.s8 %v1071
  %v1073 = vlaneseq
  %v1074 = vshrl.u32 %v1073, 7
  %v1075 = vsub.s32 %v1072, %v1074
  %v1076 = vrot.slane %v1069, %v1075
  %v1077 = vcombine.high %v1076, %v1076
  %v1079 = vunpack.c.l.s4 1966171168
  %v1080 = vunpack.c.0.s8 %v1079
  %v1081 = vlaneseq
  %v1082 = vshrl.u32 %v1081, 7
  %v1083 = vsub.s32 %v1080, %v1082
  %v1084 = vrot.slane %v1076, %v1083
  %v1086 = vunpack.c.l.s4 1966171168
  %v1087 = vunpack.c.0.s8 %v1086
  %v1088 = vlaneseq
  %v1089 = vshrl.u32 %v1088, 7
  %v1090 = vsub.s32 %v1087, %v1089
  %v1091 = vrot.slane %v1077, %v1090
  %v1092 = vlaneseq
  %v1093 = vshrl.u32 %v1092, 7
  %v1094 = vsub.s32 0, %v1093
  %v1095 = vrot.slane %v1084, %v1094
  %v1096 = vlaneseq
  %v1097 = vshrl.u32 %v1096, 7
  %v1098 = vsub.s32 1, %v1097
  %v1099 = vrot.slane %v1084, %v1098
  %v1100 = vlaneseq
  %v1101 = vshrl.u32 %v1100, 7
  %v1102 = vsub.s32 0, %v1101
  %v1103 = vrot.slane %v1091, %v1102
  %v1104 = vlaneseq
  %v1105 = vshrl.u32 %v1104, 7
  %v1106 = vsub.s32 1, %v1105
  %v1107 = vrot.slane %v1091, %v1106
  %v1114 = vcombine.low %v745, %v746
  %v1116 = vunpack.c.l.s4 1966171168
  %v1117 = vunpack.c.0.s8 %v1116
  %v1118 = vlaneseq
  %v1119 = vshrl.u32 %v1118, 7
  %v1120 = vsub.s32 %v1117, %v1119
  %v1121 = vrot.slane %v1114, %v1120
  %v1122 = vcombine.high %v1121, %v1121
  %v1124 = vunpack.c.l.s4 1966171168
  %v1125 = vunpack.c.0.s8 %v1124
  %v1126 = vlaneseq
  %v1127 = vshrl.u32 %v1126, 7
  %v1128 = vsub.s32 %v1125, %v1127
  %v1129 = vrot.slane %v1121, %v1128
  %v1131 = vunpack.c.l.s4 1966171168
  %v1132 = vunpack.c.0.s8 %v1131
  %v1133 = vlaneseq
  %v1134 = vshrl.u32 %v1133, 7
  %v1135 = vsub.s32 %v1132, %v1134
  %v1136 = vrot.slane %v1122, %v1135
  %v1137 = vlaneseq
  %v1138 = vshrl.u32 %v1137, 7
  %v1139 = vsub.s32 0, %v1138
  %v1140 = vrot.slane %v1129, %v1139
  %v1141 = vlaneseq
  %v1142 = vshrl.u32 %v1141, 7
  %v1143 = vsub.s32 1, %v1142
  %v1144 = vrot.slane %v1129, %v1143
  %v1145 = vlaneseq
  %v1146 = vshrl.u32 %v1145, 7
  %v1147 = vsub.s32 0, %v1146
  %v1148 = vrot.slane %v1136, %v1147
  %v1149 = vlaneseq
  %v1150 = vshrl.u32 %v1149, 7
  %v1151 = vsub.s32 1, %v1150
  %v1152 = vrot.slane %v1136, %v1151
  %v1157 = vmul.f32 %v1095, %v1057
  %v1158 = vmul.f32 %v1099, %v1059
  %v1159 = vmul.f32 %v1103, %v1063
  %v1160 = vmul.f32 %v1107, %v1065
  %1161 = vmatprep.subr.mxu0 0.0
  %1162 = vmatpush1.msra.mxu0 %v27
  %1163 = vmatprep.subr.mxu0 0.0
  %1164 = vmatpush1.msra.mxu0 %v28
  %1165 = vmatprep.subr.mxu0 0.0
  %1166 = vmatpush1.msra.mxu0 %v29
  %1167 = vmatprep.subr.mxu0 0.0
  %1168 = vmatpush1.msra.mxu0 %v30
  %1169 = vmatprep.subr.mxu0 0.0
  %1170 = vmatpush1.msra.mxu0 %v31
  %1171 = vmatprep.subr.mxu0 0.0
  %1172 = vmatpush1.msra.mxu0 %v32
  %1173 = vmatprep.subr.mxu0 0.0
  %1174 = vmatpush1.msra.mxu0 %v33
  %1175 = vmatprep.subr.mxu0 0.0
  %1176 = vmatpush1.msra.mxu0 %v34
  %1177 = vmatprep.subr.mxu0 0.0
  %1178 = vmatpush1.msra.mxu0 %v35
  %1179 = vmatprep.subr.mxu0 0.0
  %1180 = vmatpush1.msra.mxu0 %v36
  %1181 = vmatprep.subr.mxu0 0.0
  %1182 = vmatpush1.msra.mxu0 %v37
  %1183 = vmatprep.subr.mxu0 0.0
  %1184 = vmatpush1.msra.mxu0 %v38
  %1185 = vmatprep.subr.mxu0 0.0
  %1186 = vmatpush1.msra.mxu0 %v39
  %1187 = vmatprep.subr.mxu0 0.0
  %1188 = vmatpush1.msra.mxu0 %v40
  %1189 = vmatprep.subr.mxu0 0.0
  %1190 = vmatpush1.msra.mxu0 %v41
  %1191 = vmatprep.subr.mxu0 0.0
  %1192 = vmatpush1.msra.mxu0 %v42
  %1193 = vmatprep.subr.mxu0 0.0
  %1194 = vmatpush1.msra.mxu0 %v43
  %1195 = vmatprep.subr.mxu0 0.0
  %1196 = vmatpush1.msra.mxu0 %v44
  %1197 = vmatprep.subr.mxu0 0.0
  %1198 = vmatpush1.msra.mxu0 %v45
  %1199 = vmatprep.subr.mxu0 0.0
  %1200 = vmatpush1.msra.mxu0 %v46
  %1201 = vmatprep.subr.mxu0 0.0
  %1202 = vmatpush1.msra.mxu0 %v47
  %1203 = vmatprep.subr.mxu0 0.0
  %1204 = vmatpush1.msra.mxu0 %v48
  %1205 = vmatprep.subr.mxu0 0.0
  %1206 = vmatpush1.msra.mxu0 %v49
  %1207 = vmatprep.subr.mxu0 0.0
  %1208 = vmatpush1.msra.mxu0 %v50
  %1209 = vmatprep.subr.mxu0 0.0
  %1210 = vmatpush1.msra.mxu0 %v51
  %1211 = vmatprep.subr.mxu0 0.0
  %1212 = vmatpush1.msra.mxu0 %v52
  %1213 = vmatprep.subr.mxu0 0.0
  %1214 = vmatpush1.msra.mxu0 %v53
  %1215 = vmatprep.subr.mxu0 0.0
  %1216 = vmatpush1.msra.mxu0 %v54
  %1217 = vmatprep.subr.mxu0 0.0
  %1218 = vmatpush1.msra.mxu0 %v55
  %1219 = vmatprep.subr.mxu0 0.0
  %1220 = vmatpush1.msra.mxu0 %v56
  %1221 = vmatprep.subr.mxu0 0.0
  %1222 = vmatpush1.msra.mxu0 %v57
  %1223 = vmatprep.subr.mxu0 0.0
  %1224 = vmatpush1.msra.mxu0 %v58
  %1225 = vmatprep.mubr.f32.mxu0 %v1158
  %1226 = vmatmul.mubr.f32.gmra.mrb[0].mxu0 %v1157
  %v1227 = vpop.f32.mrb[0].mxu0
  %v1228 = vadd.f32 0.0, %v1227
  %v1229 = vpop.f32.mrb[0].mxu0
  %1230 = vmatprep.mubr.f32.mxu0 %v1160
  %1231 = vmatmul.mubr.f32.gmra.mrb[0].mxu0 %v1159
  %v1232 = vpop.f32.mrb[0].mxu0
  %v1233 = vadd.f32 0.0, %v1232
  %v1234 = vpop.f32.mrb[0].mxu0
  %1235 = vdwg.mxu0
  %v1236 = vmul.f32 %v1140, %v897
  %v1237 = vmul.f32 %v1144, %v899
  %v1238 = vmul.f32 %v1148, %v903
  %v1239 = vmul.f32 %v1152, %v905
  %1240 = vmatprep.subr.mxu0 0.0
  %1241 = vmatpush1.msra.mxu0 %v59
  %1242 = vmatprep.subr.mxu0 0.0
  %1243 = vmatpush1.msra.mxu0 %v60
  %1244 = vmatprep.subr.mxu0 0.0
  %1245 = vmatpush1.msra.mxu0 %v61
  %1246 = vmatprep.subr.mxu0 0.0
  %1247 = vmatpush1.msra.mxu0 %v62
  %1248 = vmatprep.subr.mxu0 0.0
  %1249 = vmatpush1.msra.mxu0 %v63
  %1250 = vmatprep.subr.mxu0 0.0
  %1251 = vmatpush1.msra.mxu0 %v64
  %1252 = vmatprep.subr.mxu0 0.0
  %1253 = vmatpush1.msra.mxu0 %v65
  %1254 = vmatprep.subr.mxu0 0.0
  %1255 = vmatpush1.msra.mxu0 %v66
  %1256 = vmatprep.subr.mxu0 0.0
  %1257 = vmatpush1.msra.mxu0 %v67
  %1258 = vmatprep.subr.mxu0 0.0
  %1259 = vmatpush1.msra.mxu0 %v68
  %1260 = vmatprep.subr.mxu0 0.0
  %1261 = vmatpush1.msra.mxu0 %v69
  %1262 = vmatprep.subr.mxu0 0.0
  %1263 = vmatpush1.msra.mxu0 %v70
  %1264 = vmatprep.subr.mxu0 0.0
  %1265 = vmatpush1.msra.mxu0 %v71
  %1266 = vmatprep.subr.mxu0 0.0
  %1267 = vmatpush1.msra.mxu0 %v72
  %1268 = vmatprep.subr.mxu0 0.0
  %1269 = vmatpush1.msra.mxu0 %v73
  %1270 = vmatprep.subr.mxu0 0.0
  %1271 = vmatpush1.msra.mxu0 %v74
  %1272 = vmatprep.subr.mxu0 0.0
  %1273 = vmatpush1.msra.mxu0 %v75
  %1274 = vmatprep.subr.mxu0 0.0
  %1275 = vmatpush1.msra.mxu0 %v76
  %1276 = vmatprep.subr.mxu0 0.0
  %1277 = vmatpush1.msra.mxu0 %v77
  %1278 = vmatprep.subr.mxu0 0.0
  %1279 = vmatpush1.msra.mxu0 %v78
  %1280 = vmatprep.subr.mxu0 0.0
  %1281 = vmatpush1.msra.mxu0 %v79
  %1282 = vmatprep.subr.mxu0 0.0
  %1283 = vmatpush1.msra.mxu0 %v80
  %1284 = vmatprep.subr.mxu0 0.0
  %1285 = vmatpush1.msra.mxu0 %v81
  %1286 = vmatprep.subr.mxu0 0.0
  %1287 = vmatpush1.msra.mxu0 %v82
  %1288 = vmatprep.subr.mxu0 0.0
  %1289 = vmatpush1.msra.mxu0 %v83
  %1290 = vmatprep.subr.mxu0 0.0
  %1291 = vmatpush1.msra.mxu0 %v84
  %1292 = vmatprep.subr.mxu0 0.0
  %1293 = vmatpush1.msra.mxu0 %v85
  %1294 = vmatprep.subr.mxu0 0.0
  %1295 = vmatpush1.msra.mxu0 %v86
  %1296 = vmatprep.subr.mxu0 0.0
  %1297 = vmatpush1.msra.mxu0 %v87
  %1298 = vmatprep.subr.mxu0 0.0
  %1299 = vmatpush1.msra.mxu0 %v88
  %1300 = vmatprep.subr.mxu0 0.0
  %1301 = vmatpush1.msra.mxu0 %v89
  %1302 = vmatprep.subr.mxu0 0.0
  %1303 = vmatpush1.msra.mxu0 %v90
  %1304 = vmatprep.mubr.f32.mxu0 %v1237
  %1305 = vmatmul.mubr.f32.gmra.mrb[0].mxu0 %v1236
  %v1306 = vpop.f32.mrb[0].mxu0
  %v1307 = vadd.f32 0.0, %v1306
  %v1308 = vpop.f32.mrb[0].mxu0
  %1309 = vmatprep.mubr.f32.mxu0 %v1239
  %1310 = vmatmul.mubr.f32.gmra.mrb[0].mxu0 %v1238
  %v1311 = vpop.f32.mrb[0].mxu0
  %v1312 = vadd.f32 0.0, %v1311
  %v1313 = vpop.f32.mrb[0].mxu0
  %1314 = vdwg.mxu0
  %1317 = vrot.lane.b32.xlu0 %v1307, 16
  %v1318 = vpop.permute.xlu0 %1317
  %1319 = vrot.lane.b32.xlu0 %v1312, 16
  %v1320 = vpop.permute.xlu0 %1319
  %v1323 = vsel %vm594, %v1228, %v1318
  %v1324 = vsel %vm594, %v1233, %v1320
  %vm1325 = vcmask 261120
  %1326 = vst.msk [vmem:[%s6] sm:$0xff] %vm1325, %v1323
  %1327 = vst.msk [vmem:[%s6 + $0x8] sm:$0xff] %vm1325, %v1324
  // Predicated region
  $region26: #{fr_block.1} parent=0 // pred_check
    _
  $region27: #{fr_block.1} parent=0 // pred_check_branch
    %1329 = sbr.rel (0) target = $region29
  $region28: #{fr_block.1} parent=0 // pred_region
    _
  $region29: #{fr_block.1} parent=0 // pred_fallthru
    _
  // Predicated region
  $region30: #{fr_block.1} parent=0 // pred_check
    _
  $region31: #{fr_block.1} parent=0 // pred_check_branch
    %1331 = sbr.rel (0) target = $region33
  $region32: #{fr_block.1} parent=0 // pred_region
    _
  $region33: #{fr_block.1} parent=0 // pred_fallthru
    _

</llo_original>
